<compile_context>
chip_gen: v5e
topology: v5e:2x2
jax: 0.10.0
libtpu: 0.0.40
codegen_flags: <defaults>
</compile_context>

<pallas_src>
import functools

import jax
import jax.numpy as jnp
from jax.experimental import pallas as pl
from jax.experimental.pallas import tpu as pltpu


def _round_up(x, m):
    return (x + m - 1) // m * m


# ----------------------------- Pallas kernel --------------------------------
def _dsrae_decoder_kernel(
    x_ref,      # (TC, Bt, d_in)       time-chunk x batch-tile input block
    w1_ref,     # (d_in + H1, 4*H1)    [W_ih1 ; W_hh1]^T, g-columns pre-scaled
    b1_ref,     # (1, 4*H1)            bias_ih1 + bias_hh1, g pre-scaled
    w2_ref,     # (H1 + H2, 4*H2)      [W_ih2 ; W_hh2]^T, g pre-scaled
    b2_ref,     # (1, 4*H2)
    wd_ref,     # (H2, Vp)             de_emd weight (transposed, lane-padded)
    bd_ref,     # (1, Vp)
    out_ref,    # (TC, Bt, Vp)         lane-dense output block
    y2_ref,     # scratch (TC*Bt, H2)  per-chunk layer-2 activations
    h1_ref, c1_ref, h2_ref, c2_ref,    # scratch LSTM states carried over chunks
    *, TC, Bt, H1, H2,
):
    f32 = jnp.float32

    # Re-initialize the recurrence at the first time chunk of every batch tile.
    @pl.when(pl.program_id(1) == 0)
    def _():
        h1_ref[...] = jnp.zeros_like(h1_ref)
        c1_ref[...] = jnp.zeros_like(c1_ref)
        h2_ref[...] = jnp.zeros_like(h2_ref)
        c2_ref[...] = jnp.zeros_like(c2_ref)

    # Hoisted, loop-invariant loads / broadcasts (once per chunk, not per step).
    w1 = w1_ref[...]
    w2 = w2_ref[...]
    b1 = jnp.broadcast_to(b1_ref[...], (Bt, 4 * H1))
    b2 = jnp.broadcast_to(b2_ref[...], (Bt, 4 * H2))

    def lstm_step(gates, c_prev, H):
        # One full-width sigmoid per layer (single EUP pass); the g-gate
        # columns were pre-scaled by 2 in the wrapper, so
        # tanh(g) = 2*sigmoid(2g) - 1 is just a VPU affine fixup.
        s = jax.nn.sigmoid(gates)
        i = s[:, 0 * H:1 * H]
        f = s[:, 1 * H:2 * H]
        g = 2.0 * s[:, 2 * H:3 * H] - 1.0
        o = s[:, 3 * H:4 * H]
        c = f * c_prev + i * g
        h = o * jnp.tanh(c)
        return h, c

    # States carried in vregs inside the chunk (one VMEM round trip per chunk).
    h1 = h1_ref[...]
    c1 = c1_ref[...]
    h2 = h2_ref[...]
    c2 = c2_ref[...]

    # Fully unrolled chunk loop: TC is small & static, so every slice/store
    # below uses static, sublane-aligned indices (Bt is a multiple of 8).
    for t in range(TC):
        # --- LSTM layer 1 (+ tanh): ONE fused MXU push per step ---
        gates1 = jnp.dot(jnp.concatenate([x_ref[t], h1], axis=1), w1,
                         preferred_element_type=f32) + b1
        h1, c1 = lstm_step(gates1, c1, H1)
        y1 = jnp.tanh(h1)

        # --- LSTM layer 2 (+ tanh): ONE fused MXU push per step ---
        gates2 = jnp.dot(jnp.concatenate([y1, h2], axis=1), w2,
                         preferred_element_type=f32) + b2
        h2, c2 = lstm_step(gates2, c2, H2)
        y2_ref[t * Bt:(t + 1) * Bt, :] = jnp.tanh(h2)

    # Write the recurrence state back for the next time chunk.
    h1_ref[...] = h1
    c1_ref[...] = c1
    h2_ref[...] = h2
    c2_ref[...] = c2

    # Deferred de_emd Linear + tanh: ONE batched matmul per chunk, then
    # lane-dense (Vp % 128 == 0) per-step stores (avoids a 3-D value reshape).
    out2d = jnp.tanh(
        jnp.dot(y2_ref[...], wd_ref[...], preferred_element_type=f32)
        + bd_ref[...])
    for t in range(TC):
        out_ref[t] = out2d[t * Bt:(t + 1) * Bt, :].astype(out_ref.dtype)


# ------------------------------ JAX wrapper ----------------------------------
def dsrae_decoder_forward(x, params, *, time_chunk=8):
    """x: (B, T, d_lstm2) batch-first, like the PyTorch module -> (B, T, d_vol)."""
    B, T, d_in = x.shape
    H1 = params["w_hh1"].shape[1]
    H2 = params["w_hh2"].shape[1]
    d_vol = params["de_emd_w"].shape[0]

    # Batch-tile / time-chunk geometry (batch tiles shard across TCs on v7x).
    if B <= 128:
        Bp = _round_up(B, 8)
        Bt = Bp
    else:
        Bp = _round_up(B, 128)
        Bt = 128
    nbt = Bp // Bt

    TC = min(time_chunk, T)
    Tp = _round_up(T, TC)
    ntc = Tp // TC

    Vp = _round_up(d_vol, 128)   # lane-dense final store (unmasked vst)
    f32 = jnp.float32

    # time-major, time/batch-padded input (Tp, Bp, d_in)
    xt = jnp.transpose(x, (1, 0, 2)).astype(f32)
    xt = jnp.pad(xt, ((0, Tp - T), (0, Bp - B), (0, 0)))

    # --- parameter prep (plain-JAX glue) ---
    # Pre-scale the g-gate rows by 2 so the kernel needs a single sigmoid
    # (tanh(x) = 2*sigmoid(2x) - 1), and concatenate W_ih / W_hh so each LSTM
    # layer is one fused matmul per step.
    def g_scale(H):
        return jnp.concatenate(
            [jnp.ones((2 * H,)), 2.0 * jnp.ones((H,)), jnp.ones((H,))]
        ).astype(f32)

    s1 = g_scale(H1)
    s2 = g_scale(H2)
    w1 = jnp.concatenate([(params["w_ih1"] * s1[:, None]).T,
                          (params["w_hh1"] * s1[:, None]).T], axis=0).astype(f32)
    b1 = ((params["b_ih1"] + params["b_hh1"]) * s1)[None, :].astype(f32)
    w2 = jnp.concatenate([(params["w_ih2"] * s2[:, None]).T,
                          (params["w_hh2"] * s2[:, None]).T], axis=0).astype(f32)
    b2 = ((params["b_ih2"] + params["b_hh2"]) * s2)[None, :].astype(f32)
    wd = jnp.pad(params["de_emd_w"].T.astype(f32), ((0, 0), (0, Vp - d_vol)))
    bd = jnp.pad(params["de_emd_b"].astype(f32), (0, Vp - d_vol))[None, :]

    kernel = functools.partial(_dsrae_decoder_kernel, TC=TC, Bt=Bt, H1=H1, H2=H2)

    # VMEM limit: derive per generation with headroom (never request the whole
    # physical VMEM of a v7x core); fall back to the compiler default.
    try:
        vmem_limit = int(0.75 * pltpu.get_tpu_info().vmem_capacity_bytes)
    except Exception:
        vmem_limit = None

    grid_spec = pltpu.PrefetchScalarGridSpec(
        num_scalar_prefetch=0,
        grid=(nbt, ntc),                    # batch tiles (parallel) x time chunks
        in_specs=[
            pl.BlockSpec((TC, Bt, d_in), lambda b, t: (t, b, 0)),
            pl.BlockSpec((d_in + H1, 4 * H1), lambda b, t: (0, 0)),
            pl.BlockSpec((1, 4 * H1), lambda b, t: (0, 0)),
            pl.BlockSpec((H1 + H2, 4 * H2), lambda b, t: (0, 0)),
            pl.BlockSpec((1, 4 * H2), lambda b, t: (0, 0)),
            pl.BlockSpec((H2, Vp), lambda b, t: (0, 0)),
            pl.BlockSpec((1, Vp), lambda b, t: (0, 0)),
        ],
        out_specs=pl.BlockSpec((TC, Bt, Vp), lambda b, t: (t, b, 0)),
        scratch_shapes=[
            pltpu.VMEM((TC * Bt, H2), f32),   # per-chunk layer-2 activations
            pltpu.VMEM((Bt, H1), f32),        # h1
            pltpu.VMEM((Bt, H1), f32),        # c1
            pltpu.VMEM((Bt, H2), f32),        # h2
            pltpu.VMEM((Bt, H2), f32),        # c2
        ],
    )

    out = pl.pallas_call(
        kernel,
        out_shape=jax.ShapeDtypeStruct((Tp, Bp, Vp), f32),
        grid_spec=grid_spec,
        compiler_params=pltpu.CompilerParams(
            dimension_semantics=("parallel", "arbitrary"),
            vmem_limit_bytes=vmem_limit),
    )(xt, w1, b1, w2, b2, wd, bd)

    out = out[:T, :B, :d_vol]                 # strip time/batch/lane padding
    return jnp.transpose(out, (1, 0, 2))      # back to (B, T, d_vol)


# --------------------------- deterministic params ----------------------------
def init_params(key, d_vol, d_emd, d_lstm1, d_lstm2):
    """PyTorch-shaped parameters, uniform(-1/sqrt(H), 1/sqrt(H)) like nn.LSTM."""
    ks = jax.random.split(key, 10)

    def u(k, shape, bound):
        return jax.random.uniform(k, shape, jnp.float32, -bound, bound)

    k1 = 1.0 / jnp.sqrt(d_lstm1)
    k2 = 1.0 / jnp.sqrt(d_emd)
    k3 = 1.0 / jnp.sqrt(d_emd)
    return {
        # lstm1: input d_lstm2 -> hidden d_lstm1
        "w_ih1": u(ks[0], (4 * d_lstm1, d_lstm2), k1),
        "w_hh1": u(ks[1], (4 * d_lstm1, d_lstm1), k1),
        "b_ih1": u(ks[2], (4 * d_lstm1,), k1),
        "b_hh1": u(ks[3], (4 * d_lstm1,), k1),
        # lstm2: input d_lstm1 -> hidden d_emd
        "w_ih2": u(ks[4], (4 * d_emd, d_lstm1), k2),
        "w_hh2": u(ks[5], (4 * d_emd, d_emd), k2),
        "b_ih2": u(ks[6], (4 * d_emd,), k2),
        "b_hh2": u(ks[7], (4 * d_emd,), k2),
        # de_emd: Linear(d_emd, d_vol)
        "de_emd_w": u(ks[8], (d_vol, d_emd), k3),
        "de_emd_b": u(ks[9], (d_vol,), k3),
    }


# ----------------------------- pure-JAX reference ----------------------------
def _lstm_ref(x, w_ih, w_hh, b_ih, b_hh):
    B, T, _ = x.shape
    H = w_hh.shape[1]
    h = jnp.zeros((B, H), jnp.float32)
    c = jnp.zeros((B, H), jnp.float32)
    outs = []
    for t in range(T):
        gates = x[:, t] @ w_ih.T + b_ih + h @ w_hh.T + b_hh
        i, f, g, o = jnp.split(gates, 4, axis=1)
        c = jax.nn.sigmoid(f) * c + jax.nn.sigmoid(i) * jnp.tanh(g)
        h = jax.nn.sigmoid(o) * jnp.tanh(c)
        outs.append(h)
    return jnp.stack(outs, axis=1)


def dsrae_decoder_ref(x, p):
    y = jnp.tanh(_lstm_ref(x, p["w_ih1"], p["w_hh1"], p["b_ih1"], p["b_hh1"]))
    y = jnp.tanh(_lstm_ref(y, p["w_ih2"], p["w_hh2"], p["b_ih2"], p["b_hh2"]))
    return jnp.tanh(y @ p["de_emd_w"].T + p["de_emd_b"])


# ------------------------------------ main -----------------------------------
if __name__ == "__main__":
    # Small shapes consistent with the module's forward:
    #   x: (B, T, d_lstm2) -> out: (B, T, d_vol)
    B, T = 2, 8
    d_vol, d_emd, d_lstm1, d_lstm2 = 64, 32, 16, 8

    key = jax.random.PRNGKey(0)
    kx, kp = jax.random.split(key)
    x = jax.random.normal(kx, (B, T, d_lstm2), jnp.float32)
    params = init_params(kp, d_vol, d_emd, d_lstm1, d_lstm2)

    out = dsrae_decoder_forward(x, params)
    out = jax.block_until_ready(out)

    ref = dsrae_decoder_ref(x, params)
    assert out.shape == (B, T, d_vol), out.shape
    assert jnp.allclose(out, ref, atol=1e-4, rtol=1e-4), float(
        jnp.max(jnp.abs(out - ref)))

    print("KERNEL_OK")
</pallas_src>

<mosaic_0001>
module attributes {stable_mosaic.version = 11 : i64} {
  func.func @_dsrae_decoder_kernel(%arg0: i32, %arg1: i32, %arg2: memref<8x8x8xf32, #tpu.memory_space<vmem>>, %arg3: memref<24x64xf32, #tpu.memory_space<vmem>>, %arg4: memref<1x64xf32, #tpu.memory_space<vmem>>, %arg5: memref<48x128xf32, #tpu.memory_space<vmem>>, %arg6: memref<1x128xf32, #tpu.memory_space<vmem>>, %arg7: memref<32x128xf32, #tpu.memory_space<vmem>>, %arg8: memref<1x128xf32, #tpu.memory_space<vmem>>, %arg9: memref<8x8x128xf32, #tpu.memory_space<vmem>>, %arg10: memref<64x32xf32, #tpu.memory_space<vmem>>, %arg11: memref<8x16xf32, #tpu.memory_space<vmem>>, %arg12: memref<8x16xf32, #tpu.memory_space<vmem>>, %arg13: memref<8x32xf32, #tpu.memory_space<vmem>>, %arg14: memref<8x32xf32, #tpu.memory_space<vmem>>) attributes {dimension_semantics = [#tpu.dimension_semantics<parallel>, #tpu.dimension_semantics<arbitrary>], iteration_bounds = array<i64: 1, 1>, scalar_prefetch = 0 : i64, scratch_operands = 5 : i64, tpu.core_type = #tpu.core_type<tc>, window_params = [{transform_indices = @transform_0, window_bounds = array<i64: 8, 8, 8>}, {pipeline_mode = #tpu.pipeline_mode<synchronous>, transform_indices = @transform_1, window_bounds = array<i64: 24, 64>}, {pipeline_mode = #tpu.pipeline_mode<synchronous>, transform_indices = @transform_2, window_bounds = array<i64: 1, 64>}, {pipeline_mode = #tpu.pipeline_mode<synchronous>, transform_indices = @transform_3, window_bounds = array<i64: 48, 128>}, {pipeline_mode = #tpu.pipeline_mode<synchronous>, transform_indices = @transform_4, window_bounds = array<i64: 1, 128>}, {pipeline_mode = #tpu.pipeline_mode<synchronous>, transform_indices = @transform_5, window_bounds = array<i64: 32, 128>}, {pipeline_mode = #tpu.pipeline_mode<synchronous>, transform_indices = @transform_6, window_bounds = array<i64: 1, 128>}, {transform_indices = @transform_7, window_bounds = array<i64: 8, 8, 128>}]} {
    %c0_i32 = arith.constant 0 : i32
    %0 = arith.cmpi eq, %arg1, %c0_i32 : i32
    %1 = arith.extui %0 : i1 to i32
    %c0_i32_0 = arith.constant 0 : i32
    %2 = arith.cmpi ne, %1, %c0_i32_0 : i32
    scf.if %2 {
      %cst_144 = arith.constant 0.000000e+00 : f32
      %434 = vector.broadcast %cst_144 : f32 to vector<8x16xf32>
      %c0_145 = arith.constant 0 : index
      %c0_146 = arith.constant 0 : index
      %435 = vector.load %arg11[%c0_145, %c0_146] : memref<8x16xf32, #tpu.memory_space<vmem>>, vector<8x16xf32>
      tpu.vector_store %arg11[%c0_145, %c0_146], %434 {strides = array<i32>} : memref<8x16xf32, #tpu.memory_space<vmem>>, vector<8x16xf32>,
      %cst_147 = arith.constant 0.000000e+00 : f32
      %436 = vector.broadcast %cst_147 : f32 to vector<8x16xf32>
      %c0_148 = arith.constant 0 : index
      %c0_149 = arith.constant 0 : index
      %437 = vector.load %arg12[%c0_148, %c0_149] : memref<8x16xf32, #tpu.memory_space<vmem>>, vector<8x16xf32>
      tpu.vector_store %arg12[%c0_148, %c0_149], %436 {strides = array<i32>} : memref<8x16xf32, #tpu.memory_space<vmem>>, vector<8x16xf32>,
      %cst_150 = arith.constant 0.000000e+00 : f32
      %438 = vector.broadcast %cst_150 : f32 to vector<8x32xf32>
      %c0_151 = arith.constant 0 : index
      %c0_152 = arith.constant 0 : index
      %439 = vector.load %arg13[%c0_151, %c0_152] : memref<8x32xf32, #tpu.memory_space<vmem>>, vector<8x32xf32>
      tpu.vector_store %arg13[%c0_151, %c0_152], %438 {strides = array<i32>} : memref<8x32xf32, #tpu.memory_space<vmem>>, vector<8x32xf32>,
      %cst_153 = arith.constant 0.000000e+00 : f32
      %440 = vector.broadcast %cst_153 : f32 to vector<8x32xf32>
      %c0_154 = arith.constant 0 : index
      %c0_155 = arith.constant 0 : index
      %441 = vector.load %arg14[%c0_154, %c0_155] : memref<8x32xf32, #tpu.memory_space<vmem>>, vector<8x32xf32>
      tpu.vector_store %arg14[%c0_154, %c0_155], %440 {strides = array<i32>} : memref<8x32xf32, #tpu.memory_space<vmem>>, vector<8x32xf32>,
    } else {
    }
    %c0 = arith.constant 0 : index
    %c0_1 = arith.constant 0 : index
    %3 = vector.load %arg3[%c0, %c0_1] : memref<24x64xf32, #tpu.memory_space<vmem>>, vector<24x64xf32>
    %c0_2 = arith.constant 0 : index
    %c0_3 = arith.constant 0 : index
    %4 = vector.load %arg5[%c0_2, %c0_3] : memref<48x128xf32, #tpu.memory_space<vmem>>, vector<48x128xf32>
    %c0_4 = arith.constant 0 : index
    %c0_5 = arith.constant 0 : index
    %5 = vector.load %arg4[%c0_4, %c0_5] : memref<1x64xf32, #tpu.memory_space<vmem>>, vector<1x64xf32>
    %6 = vector.shape_cast %5 : vector<1x64xf32> to vector<1x64xf32>
    %7 = vector.broadcast %6 : vector<1x64xf32> to vector<8x64xf32>
    %c0_6 = arith.constant 0 : index
    %c0_7 = arith.constant 0 : index
    %8 = vector.load %arg6[%c0_6, %c0_7] : memref<1x128xf32, #tpu.memory_space<vmem>>, vector<1x128xf32>
    %9 = vector.shape_cast %8 : vector<1x128xf32> to vector<1x128xf32>
    %10 = vector.broadcast %9 : vector<1x128xf32> to vector<8x128xf32>
    %c0_8 = arith.constant 0 : index
    %c0_9 = arith.constant 0 : index
    %11 = vector.load %arg11[%c0_8, %c0_9] : memref<8x16xf32, #tpu.memory_space<vmem>>, vector<8x16xf32>
    %c0_10 = arith.constant 0 : index
    %c0_11 = arith.constant 0 : index
    %12 = vector.load %arg12[%c0_10, %c0_11] : memref<8x16xf32, #tpu.memory_space<vmem>>, vector<8x16xf32>
    %c0_12 = arith.constant 0 : index
    %c0_13 = arith.constant 0 : index
    %13 = vector.load %arg13[%c0_12, %c0_13] : memref<8x32xf32, #tpu.memory_space<vmem>>, vector<8x32xf32>
    %c0_14 = arith.constant 0 : index
    %c0_15 = arith.constant 0 : index
    %14 = vector.load %arg14[%c0_14, %c0_15] : memref<8x32xf32, #tpu.memory_space<vmem>>, vector<8x32xf32>
    %c0_16 = arith.constant 0 : index
    %c0_17 = arith.constant 0 : index
    %c0_18 = arith.constant 0 : index
    %15 = vector.load %arg2[%c0_16, %c0_17, %c0_18] : memref<8x8x8xf32, #tpu.memory_space<vmem>>, vector<1x8x8xf32>
    %16 = vector.shape_cast %15 : vector<1x8x8xf32> to vector<8x8xf32>
    %17 = tpu.concatenate %16, %11 in 1 : vector<8x8xf32>, vector<8x16xf32> -> vector<8x24xf32>
    %cst = arith.constant dense<0.000000e+00> : vector<8x64xf32>
    %18 = tpu.matmul %17, %3, %cst {dimension_numbers = #tpu.dot_dimension_numbers<[1], [0], [0], [1], [0, 0, 1, 1], [], []>} : vector<8x24xf32>, vector<24x64xf32>, vector<8x64xf32> -> vector<8x64xf32>
    %19 = arith.addf %18, %7 : vector<8x64xf32>
    %20 = arith.negf %19 : vector<8x64xf32>
    %21 = math.exp %20 : vector<8x64xf32>
    %cst_19 = arith.constant 1.000000e+00 : f32
    %22 = vector.broadcast %cst_19 : f32 to vector<8x64xf32>
    %23 = arith.addf %22, %21 : vector<8x64xf32>
    %24 = arith.divf %22, %23 : vector<8x64xf32>
    %25 = vector.extract_strided_slice %24 {offsets = [0, 0], sizes = [8, 16], strides = [1, 1]} : vector<8x64xf32> to vector<8x16xf32>
    %26 = vector.extract_strided_slice %24 {offsets = [0, 16], sizes = [8, 16], strides = [1, 1]} : vector<8x64xf32> to vector<8x16xf32>
    %27 = vector.extract_strided_slice %24 {offsets = [0, 32], sizes = [8, 16], strides = [1, 1]} : vector<8x64xf32> to vector<8x16xf32>
    %cst_20 = arith.constant 2.000000e+00 : f32
    %28 = vector.broadcast %cst_20 : f32 to vector<8x16xf32>
    %29 = arith.mulf %28, %27 : vector<8x16xf32>
    %cst_21 = arith.constant 1.000000e+00 : f32
    %30 = vector.broadcast %cst_21 : f32 to vector<8x16xf32>
    %31 = arith.subf %29, %30 : vector<8x16xf32>
    %32 = vector.extract_strided_slice %24 {offsets = [0, 48], sizes = [8, 16], strides = [1, 1]} : vector<8x64xf32> to vector<8x16xf32>
    %33 = arith.mulf %26, %12 : vector<8x16xf32>
    %34 = arith.mulf %25, %31 : vector<8x16xf32>
    %35 = arith.addf %33, %34 : vector<8x16xf32>
    %36 = math.tanh %35 : vector<8x16xf32>
    %37 = arith.mulf %32, %36 : vector<8x16xf32>
    %38 = math.tanh %37 : vector<8x16xf32>
    %39 = tpu.concatenate %38, %13 in 1 : vector<8x16xf32>, vector<8x32xf32> -> vector<8x48xf32>
    %cst_22 = arith.constant dense<0.000000e+00> : vector<8x128xf32>
    %40 = tpu.matmul %39, %4, %cst_22 {dimension_numbers = #tpu.dot_dimension_numbers<[1], [0], [0], [1], [0, 0, 1, 1], [], []>} : vector<8x48xf32>, vector<48x128xf32>, vector<8x128xf32> -> vector<8x128xf32>
    %41 = arith.addf %40, %10 : vector<8x128xf32>
    %42 = arith.negf %41 : vector<8x128xf32>
    %43 = math.exp %42 : vector<8x128xf32>
    %cst_23 = arith.constant 1.000000e+00 : f32
    %44 = vector.broadcast %cst_23 : f32 to vector<8x128xf32>
    %45 = arith.addf %44, %43 : vector<8x128xf32>
    %46 = arith.divf %44, %45 : vector<8x128xf32>
    %47 = vector.extract_strided_slice %46 {offsets = [0, 0], sizes = [8, 32], strides = [1, 1]} : vector<8x128xf32> to vector<8x32xf32>
    %48 = vector.extract_strided_slice %46 {offsets = [0, 32], sizes = [8, 32], strides = [1, 1]} : vector<8x128xf32> to vector<8x32xf32>
    %49 = vector.extract_strided_slice %46 {offsets = [0, 64], sizes = [8, 32], strides = [1, 1]} : vector<8x128xf32> to vector<8x32xf32>
    %cst_24 = arith.constant 2.000000e+00 : f32
    %50 = vector.broadcast %cst_24 : f32 to vector<8x32xf32>
    %51 = arith.mulf %50, %49 : vector<8x32xf32>
    %cst_25 = arith.constant 1.000000e+00 : f32
    %52 = vector.broadcast %cst_25 : f32 to vector<8x32xf32>
    %53 = arith.subf %51, %52 : vector<8x32xf32>
    %54 = vector.extract_strided_slice %46 {offsets = [0, 96], sizes = [8, 32], strides = [1, 1]} : vector<8x128xf32> to vector<8x32xf32>
    %55 = arith.mulf %48, %14 : vector<8x32xf32>
    %56 = arith.mulf %47, %53 : vector<8x32xf32>
    %57 = arith.addf %55, %56 : vector<8x32xf32>
    %58 = math.tanh %57 : vector<8x32xf32>
    %59 = arith.mulf %54, %58 : vector<8x32xf32>
    %60 = math.tanh %59 : vector<8x32xf32>
    %c0_26 = arith.constant 0 : index
    %c0_27 = arith.constant 0 : index
    %61 = vector.load %arg10[%c0_26, %c0_27] : memref<64x32xf32, #tpu.memory_space<vmem>>, vector<8x32xf32>
    tpu.vector_store %arg10[%c0_26, %c0_27], %60 {strides = array<i32>} : memref<64x32xf32, #tpu.memory_space<vmem>>, vector<8x32xf32>,
    %c1 = arith.constant 1 : index
    %c0_28 = arith.constant 0 : index
    %c0_29 = arith.constant 0 : index
    %62 = vector.load %arg2[%c1, %c0_28, %c0_29] : memref<8x8x8xf32, #tpu.memory_space<vmem>>, vector<1x8x8xf32>
    %63 = vector.shape_cast %62 : vector<1x8x8xf32> to vector<8x8xf32>
    %64 = tpu.concatenate %63, %37 in 1 : vector<8x8xf32>, vector<8x16xf32> -> vector<8x24xf32>
    %cst_30 = arith.constant dense<0.000000e+00> : vector<8x64xf32>
    %65 = tpu.matmul %64, %3, %cst_30 {dimension_numbers = #tpu.dot_dimension_numbers<[1], [0], [0], [1], [0, 0, 1, 1], [], []>} : vector<8x24xf32>, vector<24x64xf32>, vector<8x64xf32> -> vector<8x64xf32>
    %66 = arith.addf %65, %7 : vector<8x64xf32>
    %67 = arith.negf %66 : vector<8x64xf32>
    %68 = math.exp %67 : vector<8x64xf32>
    %cst_31 = arith.constant 1.000000e+00 : f32
    %69 = vector.broadcast %cst_31 : f32 to vector<8x64xf32>
    %70 = arith.addf %69, %68 : vector<8x64xf32>
    %71 = arith.divf %69, %70 : vector<8x64xf32>
    %72 = vector.extract_strided_slice %71 {offsets = [0, 0], sizes = [8, 16], strides = [1, 1]} : vector<8x64xf32> to vector<8x16xf32>
    %73 = vector.extract_strided_slice %71 {offsets = [0, 16], sizes = [8, 16], strides = [1, 1]} : vector<8x64xf32> to vector<8x16xf32>
    %74 = vector.extract_strided_slice %71 {offsets = [0, 32], sizes = [8, 16], strides = [1, 1]} : vector<8x64xf32> to vector<8x16xf32>
    %cst_32 = arith.constant 2.000000e+00 : f32
    %75 = vector.broadcast %cst_32 : f32 to vector<8x16xf32>
    %76 = arith.mulf %75, %74 : vector<8x16xf32>
    %cst_33 = arith.constant 1.000000e+00 : f32
    %77 = vector.broadcast %cst_33 : f32 to vector<8x16xf32>
    %78 = arith.subf %76, %77 : vector<8x16xf32>
    %79 = vector.extract_strided_slice %71 {offsets = [0, 48], sizes = [8, 16], strides = [1, 1]} : vector<8x64xf32> to vector<8x16xf32>
    %80 = arith.mulf %73, %35 : vector<8x16xf32>
    %81 = arith.mulf %72, %78 : vector<8x16xf32>
    %82 = arith.addf %80, %81 : vector<8x16xf32>
    %83 = math.tanh %82 : vector<8x16xf32>
    %84 = arith.mulf %79, %83 : vector<8x16xf32>
    %85 = math.tanh %84 : vector<8x16xf32>
    %86 = tpu.concatenate %85, %59 in 1 : vector<8x16xf32>, vector<8x32xf32> -> vector<8x48xf32>
    %cst_34 = arith.constant dense<0.000000e+00> : vector<8x128xf32>
    %87 = tpu.matmul %86, %4, %cst_34 {dimension_numbers = #tpu.dot_dimension_numbers<[1], [0], [0], [1], [0, 0, 1, 1], [], []>} : vector<8x48xf32>, vector<48x128xf32>, vector<8x128xf32> -> vector<8x128xf32>
    %88 = arith.addf %87, %10 : vector<8x128xf32>
    %89 = arith.negf %88 : vector<8x128xf32>
    %90 = math.exp %89 : vector<8x128xf32>
    %cst_35 = arith.constant 1.000000e+00 : f32
    %91 = vector.broadcast %cst_35 : f32 to vector<8x128xf32>
    %92 = arith.addf %91, %90 : vector<8x128xf32>
    %93 = arith.divf %91, %92 : vector<8x128xf32>
    %94 = vector.extract_strided_slice %93 {offsets = [0, 0], sizes = [8, 32], strides = [1, 1]} : vector<8x128xf32> to vector<8x32xf32>
    %95 = vector.extract_strided_slice %93 {offsets = [0, 32], sizes = [8, 32], strides = [1, 1]} : vector<8x128xf32> to vector<8x32xf32>
    %96 = vector.extract_strided_slice %93 {offsets = [0, 64], sizes = [8, 32], strides = [1, 1]} : vector<8x128xf32> to vector<8x32xf32>
    %cst_36 = arith.constant 2.000000e+00 : f32
    %97 = vector.broadcast %cst_36 : f32 to vector<8x32xf32>
    %98 = arith.mulf %97, %96 : vector<8x32xf32>
    %cst_37 = arith.constant 1.000000e+00 : f32
    %99 = vector.broadcast %cst_37 : f32 to vector<8x32xf32>
    %100 = arith.subf %98, %99 : vector<8x32xf32>
    %101 = vector.extract_strided_slice %93 {offsets = [0, 96], sizes = [8, 32], strides = [1, 1]} : vector<8x128xf32> to vector<8x32xf32>
    %102 = arith.mulf %95, %57 : vector<8x32xf32>
    %103 = arith.mulf %94, %100 : vector<8x32xf32>
    %104 = arith.addf %102, %103 : vector<8x32xf32>
    %105 = math.tanh %104 : vector<8x32xf32>
    %106 = arith.mulf %101, %105 : vector<8x32xf32>
    %107 = math.tanh %106 : vector<8x32xf32>
    %c8 = arith.constant 8 : index
    %c0_38 = arith.constant 0 : index
    %108 = vector.load %arg10[%c8, %c0_38] : memref<64x32xf32, #tpu.memory_space<vmem>>, vector<8x32xf32>
    tpu.vector_store %arg10[%c8, %c0_38], %107 {strides = array<i32>} : memref<64x32xf32, #tpu.memory_space<vmem>>, vector<8x32xf32>,
    %c2 = arith.constant 2 : index
    %c0_39 = arith.constant 0 : index
    %c0_40 = arith.constant 0 : index
    %109 = vector.load %arg2[%c2, %c0_39, %c0_40] : memref<8x8x8xf32, #tpu.memory_space<vmem>>, vector<1x8x8xf32>
    %110 = vector.shape_cast %109 : vector<1x8x8xf32> to vector<8x8xf32>
    %111 = tpu.concatenate %110, %84 in 1 : vector<8x8xf32>, vector<8x16xf32> -> vector<8x24xf32>
    %cst_41 = arith.constant dense<0.000000e+00> : vector<8x64xf32>
    %112 = tpu.matmul %111, %3, %cst_41 {dimension_numbers = #tpu.dot_dimension_numbers<[1], [0], [0], [1], [0, 0, 1, 1], [], []>} : vector<8x24xf32>, vector<24x64xf32>, vector<8x64xf32> -> vector<8x64xf32>
    %113 = arith.addf %112, %7 : vector<8x64xf32>
    %114 = arith.negf %113 : vector<8x64xf32>
    %115 = math.exp %114 : vector<8x64xf32>
    %cst_42 = arith.constant 1.000000e+00 : f32
    %116 = vector.broadcast %cst_42 : f32 to vector<8x64xf32>
    %117 = arith.addf %116, %115 : vector<8x64xf32>
    %118 = arith.divf %116, %117 : vector<8x64xf32>
    %119 = vector.extract_strided_slice %118 {offsets = [0, 0], sizes = [8, 16], strides = [1, 1]} : vector<8x64xf32> to vector<8x16xf32>
    %120 = vector.extract_strided_slice %118 {offsets = [0, 16], sizes = [8, 16], strides = [1, 1]} : vector<8x64xf32> to vector<8x16xf32>
    %121 = vector.extract_strided_slice %118 {offsets = [0, 32], sizes = [8, 16], strides = [1, 1]} : vector<8x64xf32> to vector<8x16xf32>
    %cst_43 = arith.constant 2.000000e+00 : f32
    %122 = vector.broadcast %cst_43 : f32 to vector<8x16xf32>
    %123 = arith.mulf %122, %121 : vector<8x16xf32>
    %cst_44 = arith.constant 1.000000e+00 : f32
    %124 = vector.broadcast %cst_44 : f32 to vector<8x16xf32>
    %125 = arith.subf %123, %124 : vector<8x16xf32>
    %126 = vector.extract_strided_slice %118 {offsets = [0, 48], sizes = [8, 16], strides = [1, 1]} : vector<8x64xf32> to vector<8x16xf32>
    %127 = arith.mulf %120, %82 : vector<8x16xf32>
    %128 = arith.mulf %119, %125 : vector<8x16xf32>
    %129 = arith.addf %127, %128 : vector<8x16xf32>
    %130 = math.tanh %129 : vector<8x16xf32>
    %131 = arith.mulf %126, %130 : vector<8x16xf32>
    %132 = math.tanh %131 : vector<8x16xf32>
    %133 = tpu.concatenate %132, %106 in 1 : vector<8x16xf32>, vector<8x32xf32> -> vector<8x48xf32>
    %cst_45 = arith.constant dense<0.000000e+00> : vector<8x128xf32>
    %134 = tpu.matmul %133, %4, %cst_45 {dimension_numbers = #tpu.dot_dimension_numbers<[1], [0], [0], [1], [0, 0, 1, 1], [], []>} : vector<8x48xf32>, vector<48x128xf32>, vector<8x128xf32> -> vector<8x128xf32>
    %135 = arith.addf %134, %10 : vector<8x128xf32>
    %136 = arith.negf %135 : vector<8x128xf32>
    %137 = math.exp %136 : vector<8x128xf32>
    %cst_46 = arith.constant 1.000000e+00 : f32
    %138 = vector.broadcast %cst_46 : f32 to vector<8x128xf32>
    %139 = arith.addf %138, %137 : vector<8x128xf32>
    %140 = arith.divf %138, %139 : vector<8x128xf32>
    %141 = vector.extract_strided_slice %140 {offsets = [0, 0], sizes = [8, 32], strides = [1, 1]} : vector<8x128xf32> to vector<8x32xf32>
    %142 = vector.extract_strided_slice %140 {offsets = [0, 32], sizes = [8, 32], strides = [1, 1]} : vector<8x128xf32> to vector<8x32xf32>
    %143 = vector.extract_strided_slice %140 {offsets = [0, 64], sizes = [8, 32], strides = [1, 1]} : vector<8x128xf32> to vector<8x32xf32>
    %cst_47 = arith.constant 2.000000e+00 : f32
    %144 = vector.broadcast %cst_47 : f32 to vector<8x32xf32>
    %145 = arith.mulf %144, %143 : vector<8x32xf32>
    %cst_48 = arith.constant 1.000000e+00 : f32
    %146 = vector.broadcast %cst_48 : f32 to vector<8x32xf32>
    %147 = arith.subf %145, %146 : vector<8x32xf32>
    %148 = vector.extract_strided_slice %140 {offsets = [0, 96], sizes = [8, 32], strides = [1, 1]} : vector<8x128xf32> to vector<8x32xf32>
    %149 = arith.mulf %142, %104 : vector<8x32xf32>
    %150 = arith.mulf %141, %147 : vector<8x32xf32>
    %151 = arith.addf %149, %150 : vector<8x32xf32>
    %152 = math.tanh %151 : vector<8x32xf32>
    %153 = arith.mulf %148, %152 : vector<8x32xf32>
    %154 = math.tanh %153 : vector<8x32xf32>
    %c16 = arith.constant 16 : index
    %c0_49 = arith.constant 0 : index
    %155 = vector.load %arg10[%c16, %c0_49] : memref<64x32xf32, #tpu.memory_space<vmem>>, vector<8x32xf32>
    tpu.vector_store %arg10[%c16, %c0_49], %154 {strides = array<i32>} : memref<64x32xf32, #tpu.memory_space<vmem>>, vector<8x32xf32>,
    %c3 = arith.constant 3 : index
    %c0_50 = arith.constant 0 : index
    %c0_51 = arith.constant 0 : index
    %156 = vector.load %arg2[%c3, %c0_50, %c0_51] : memref<8x8x8xf32, #tpu.memory_space<vmem>>, vector<1x8x8xf32>
    %157 = vector.shape_cast %156 : vector<1x8x8xf32> to vector<8x8xf32>
    %158 = tpu.concatenate %157, %131 in 1 : vector<8x8xf32>, vector<8x16xf32> -> vector<8x24xf32>
    %cst_52 = arith.constant dense<0.000000e+00> : vector<8x64xf32>
    %159 = tpu.matmul %158, %3, %cst_52 {dimension_numbers = #tpu.dot_dimension_numbers<[1], [0], [0], [1], [0, 0, 1, 1], [], []>} : vector<8x24xf32>, vector<24x64xf32>, vector<8x64xf32> -> vector<8x64xf32>
    %160 = arith.addf %159, %7 : vector<8x64xf32>
    %161 = arith.negf %160 : vector<8x64xf32>
    %162 = math.exp %161 : vector<8x64xf32>
    %cst_53 = arith.constant 1.000000e+00 : f32
    %163 = vector.broadcast %cst_53 : f32 to vector<8x64xf32>
    %164 = arith.addf %163, %162 : vector<8x64xf32>
    %165 = arith.divf %163, %164 : vector<8x64xf32>
    %166 = vector.extract_strided_slice %165 {offsets = [0, 0], sizes = [8, 16], strides = [1, 1]} : vector<8x64xf32> to vector<8x16xf32>
    %167 = vector.extract_strided_slice %165 {offsets = [0, 16], sizes = [8, 16], strides = [1, 1]} : vector<8x64xf32> to vector<8x16xf32>
    %168 = vector.extract_strided_slice %165 {offsets = [0, 32], sizes = [8, 16], strides = [1, 1]} : vector<8x64xf32> to vector<8x16xf32>
    %cst_54 = arith.constant 2.000000e+00 : f32
    %169 = vector.broadcast %cst_54 : f32 to vector<8x16xf32>
    %170 = arith.mulf %169, %168 : vector<8x16xf32>
    %cst_55 = arith.constant 1.000000e+00 : f32
    %171 = vector.broadcast %cst_55 : f32 to vector<8x16xf32>
    %172 = arith.subf %170, %171 : vector<8x16xf32>
    %173 = vector.extract_strided_slice %165 {offsets = [0, 48], sizes = [8, 16], strides = [1, 1]} : vector<8x64xf32> to vector<8x16xf32>
    %174 = arith.mulf %167, %129 : vector<8x16xf32>
    %175 = arith.mulf %166, %172 : vector<8x16xf32>
    %176 = arith.addf %174, %175 : vector<8x16xf32>
    %177 = math.tanh %176 : vector<8x16xf32>
    %178 = arith.mulf %173, %177 : vector<8x16xf32>
    %179 = math.tanh %178 : vector<8x16xf32>
    %180 = tpu.concatenate %179, %153 in 1 : vector<8x16xf32>, vector<8x32xf32> -> vector<8x48xf32>
    %cst_56 = arith.constant dense<0.000000e+00> : vector<8x128xf32>
    %181 = tpu.matmul %180, %4, %cst_56 {dimension_numbers = #tpu.dot_dimension_numbers<[1], [0], [0], [1], [0, 0, 1, 1], [], []>} : vector<8x48xf32>, vector<48x128xf32>, vector<8x128xf32> -> vector<8x128xf32>
    %182 = arith.addf %181, %10 : vector<8x128xf32>
    %183 = arith.negf %182 : vector<8x128xf32>
    %184 = math.exp %183 : vector<8x128xf32>
    %cst_57 = arith.constant 1.000000e+00 : f32
    %185 = vector.broadcast %cst_57 : f32 to vector<8x128xf32>
    %186 = arith.addf %185, %184 : vector<8x128xf32>
    %187 = arith.divf %185, %186 : vector<8x128xf32>
    %188 = vector.extract_strided_slice %187 {offsets = [0, 0], sizes = [8, 32], strides = [1, 1]} : vector<8x128xf32> to vector<8x32xf32>
    %189 = vector.extract_strided_slice %187 {offsets = [0, 32], sizes = [8, 32], strides = [1, 1]} : vector<8x128xf32> to vector<8x32xf32>
    %190 = vector.extract_strided_slice %187 {offsets = [0, 64], sizes = [8, 32], strides = [1, 1]} : vector<8x128xf32> to vector<8x32xf32>
    %cst_58 = arith.constant 2.000000e+00 : f32
    %191 = vector.broadcast %cst_58 : f32 to vector<8x32xf32>
    %192 = arith.mulf %191, %190 : vector<8x32xf32>
    %cst_59 = arith.constant 1.000000e+00 : f32
    %193 = vector.broadcast %cst_59 : f32 to vector<8x32xf32>
    %194 = arith.subf %192, %193 : vector<8x32xf32>
    %195 = vector.extract_strided_slice %187 {offsets = [0, 96], sizes = [8, 32], strides = [1, 1]} : vector<8x128xf32> to vector<8x32xf32>
    %196 = arith.mulf %189, %151 : vector<8x32xf32>
    %197 = arith.mulf %188, %194 : vector<8x32xf32>
    %198 = arith.addf %196, %197 : vector<8x32xf32>
    %199 = math.tanh %198 : vector<8x32xf32>
    %200 = arith.mulf %195, %199 : vector<8x32xf32>
    %201 = math.tanh %200 : vector<8x32xf32>
    %c24 = arith.constant 24 : index
    %c0_60 = arith.constant 0 : index
    %202 = vector.load %arg10[%c24, %c0_60] : memref<64x32xf32, #tpu.memory_space<vmem>>, vector<8x32xf32>
    tpu.vector_store %arg10[%c24, %c0_60], %201 {strides = array<i32>} : memref<64x32xf32, #tpu.memory_space<vmem>>, vector<8x32xf32>,
    %c4 = arith.constant 4 : index
    %c0_61 = arith.constant 0 : index
    %c0_62 = arith.constant 0 : index
    %203 = vector.load %arg2[%c4, %c0_61, %c0_62] : memref<8x8x8xf32, #tpu.memory_space<vmem>>, vector<1x8x8xf32>
    %204 = vector.shape_cast %203 : vector<1x8x8xf32> to vector<8x8xf32>
    %205 = tpu.concatenate %204, %178 in 1 : vector<8x8xf32>, vector<8x16xf32> -> vector<8x24xf32>
    %cst_63 = arith.constant dense<0.000000e+00> : vector<8x64xf32>
    %206 = tpu.matmul %205, %3, %cst_63 {dimension_numbers = #tpu.dot_dimension_numbers<[1], [0], [0], [1], [0, 0, 1, 1], [], []>} : vector<8x24xf32>, vector<24x64xf32>, vector<8x64xf32> -> vector<8x64xf32>
    %207 = arith.addf %206, %7 : vector<8x64xf32>
    %208 = arith.negf %207 : vector<8x64xf32>
    %209 = math.exp %208 : vector<8x64xf32>
    %cst_64 = arith.constant 1.000000e+00 : f32
    %210 = vector.broadcast %cst_64 : f32 to vector<8x64xf32>
    %211 = arith.addf %210, %209 : vector<8x64xf32>
    %212 = arith.divf %210, %211 : vector<8x64xf32>
    %213 = vector.extract_strided_slice %212 {offsets = [0, 0], sizes = [8, 16], strides = [1, 1]} : vector<8x64xf32> to vector<8x16xf32>
    %214 = vector.extract_strided_slice %212 {offsets = [0, 16], sizes = [8, 16], strides = [1, 1]} : vector<8x64xf32> to vector<8x16xf32>
    %215 = vector.extract_strided_slice %212 {offsets = [0, 32], sizes = [8, 16], strides = [1, 1]} : vector<8x64xf32> to vector<8x16xf32>
    %cst_65 = arith.constant 2.000000e+00 : f32
    %216 = vector.broadcast %cst_65 : f32 to vector<8x16xf32>
    %217 = arith.mulf %216, %215 : vector<8x16xf32>
    %cst_66 = arith.constant 1.000000e+00 : f32
    %218 = vector.broadcast %cst_66 : f32 to vector<8x16xf32>
    %219 = arith.subf %217, %218 : vector<8x16xf32>
    %220 = vector.extract_strided_slice %212 {offsets = [0, 48], sizes = [8, 16], strides = [1, 1]} : vector<8x64xf32> to vector<8x16xf32>
    %221 = arith.mulf %214, %176 : vector<8x16xf32>
    %222 = arith.mulf %213, %219 : vector<8x16xf32>
    %223 = arith.addf %221, %222 : vector<8x16xf32>
    %224 = math.tanh %223 : vector<8x16xf32>
    %225 = arith.mulf %220, %224 : vector<8x16xf32>
    %226 = math.tanh %225 : vector<8x16xf32>
    %227 = tpu.concatenate %226, %200 in 1 : vector<8x16xf32>, vector<8x32xf32> -> vector<8x48xf32>
    %cst_67 = arith.constant dense<0.000000e+00> : vector<8x128xf32>
    %228 = tpu.matmul %227, %4, %cst_67 {dimension_numbers = #tpu.dot_dimension_numbers<[1], [0], [0], [1], [0, 0, 1, 1], [], []>} : vector<8x48xf32>, vector<48x128xf32>, vector<8x128xf32> -> vector<8x128xf32>
    %229 = arith.addf %228, %10 : vector<8x128xf32>
    %230 = arith.negf %229 : vector<8x128xf32>
    %231 = math.exp %230 : vector<8x128xf32>
    %cst_68 = arith.constant 1.000000e+00 : f32
    %232 = vector.broadcast %cst_68 : f32 to vector<8x128xf32>
    %233 = arith.addf %232, %231 : vector<8x128xf32>
    %234 = arith.divf %232, %233 : vector<8x128xf32>
    %235 = vector.extract_strided_slice %234 {offsets = [0, 0], sizes = [8, 32], strides = [1, 1]} : vector<8x128xf32> to vector<8x32xf32>
    %236 = vector.extract_strided_slice %234 {offsets = [0, 32], sizes = [8, 32], strides = [1, 1]} : vector<8x128xf32> to vector<8x32xf32>
    %237 = vector.extract_strided_slice %234 {offsets = [0, 64], sizes = [8, 32], strides = [1, 1]} : vector<8x128xf32> to vector<8x32xf32>
    %cst_69 = arith.constant 2.000000e+00 : f32
    %238 = vector.broadcast %cst_69 : f32 to vector<8x32xf32>
    %239 = arith.mulf %238, %237 : vector<8x32xf32>
    %cst_70 = arith.constant 1.000000e+00 : f32
    %240 = vector.broadcast %cst_70 : f32 to vector<8x32xf32>
    %241 = arith.subf %239, %240 : vector<8x32xf32>
    %242 = vector.extract_strided_slice %234 {offsets = [0, 96], sizes = [8, 32], strides = [1, 1]} : vector<8x128xf32> to vector<8x32xf32>
    %243 = arith.mulf %236, %198 : vector<8x32xf32>
    %244 = arith.mulf %235, %241 : vector<8x32xf32>
    %245 = arith.addf %243, %244 : vector<8x32xf32>
    %246 = math.tanh %245 : vector<8x32xf32>
    %247 = arith.mulf %242, %246 : vector<8x32xf32>
    %248 = math.tanh %247 : vector<8x32xf32>
    %c32 = arith.constant 32 : index
    %c0_71 = arith.constant 0 : index
    %249 = vector.load %arg10[%c32, %c0_71] : memref<64x32xf32, #tpu.memory_space<vmem>>, vector<8x32xf32>
    tpu.vector_store %arg10[%c32, %c0_71], %248 {strides = array<i32>} : memref<64x32xf32, #tpu.memory_space<vmem>>, vector<8x32xf32>,
    %c5 = arith.constant 5 : index
    %c0_72 = arith.constant 0 : index
    %c0_73 = arith.constant 0 : index
    %250 = vector.load %arg2[%c5, %c0_72, %c0_73] : memref<8x8x8xf32, #tpu.memory_space<vmem>>, vector<1x8x8xf32>
    %251 = vector.shape_cast %250 : vector<1x8x8xf32> to vector<8x8xf32>
    %252 = tpu.concatenate %251, %225 in 1 : vector<8x8xf32>, vector<8x16xf32> -> vector<8x24xf32>
    %cst_74 = arith.constant dense<0.000000e+00> : vector<8x64xf32>
    %253 = tpu.matmul %252, %3, %cst_74 {dimension_numbers = #tpu.dot_dimension_numbers<[1], [0], [0], [1], [0, 0, 1, 1], [], []>} : vector<8x24xf32>, vector<24x64xf32>, vector<8x64xf32> -> vector<8x64xf32>
    %254 = arith.addf %253, %7 : vector<8x64xf32>
    %255 = arith.negf %254 : vector<8x64xf32>
    %256 = math.exp %255 : vector<8x64xf32>
    %cst_75 = arith.constant 1.000000e+00 : f32
    %257 = vector.broadcast %cst_75 : f32 to vector<8x64xf32>
    %258 = arith.addf %257, %256 : vector<8x64xf32>
    %259 = arith.divf %257, %258 : vector<8x64xf32>
    %260 = vector.extract_strided_slice %259 {offsets = [0, 0], sizes = [8, 16], strides = [1, 1]} : vector<8x64xf32> to vector<8x16xf32>
    %261 = vector.extract_strided_slice %259 {offsets = [0, 16], sizes = [8, 16], strides = [1, 1]} : vector<8x64xf32> to vector<8x16xf32>
    %262 = vector.extract_strided_slice %259 {offsets = [0, 32], sizes = [8, 16], strides = [1, 1]} : vector<8x64xf32> to vector<8x16xf32>
    %cst_76 = arith.constant 2.000000e+00 : f32
    %263 = vector.broadcast %cst_76 : f32 to vector<8x16xf32>
    %264 = arith.mulf %263, %262 : vector<8x16xf32>
    %cst_77 = arith.constant 1.000000e+00 : f32
    %265 = vector.broadcast %cst_77 : f32 to vector<8x16xf32>
    %266 = arith.subf %264, %265 : vector<8x16xf32>
    %267 = vector.extract_strided_slice %259 {offsets = [0, 48], sizes = [8, 16], strides = [1, 1]} : vector<8x64xf32> to vector<8x16xf32>
    %268 = arith.mulf %261, %223 : vector<8x16xf32>
    %269 = arith.mulf %260, %266 : vector<8x16xf32>
    %270 = arith.addf %268, %269 : vector<8x16xf32>
    %271 = math.tanh %270 : vector<8x16xf32>
    %272 = arith.mulf %267, %271 : vector<8x16xf32>
    %273 = math.tanh %272 : vector<8x16xf32>
    %274 = tpu.concatenate %273, %247 in 1 : vector<8x16xf32>, vector<8x32xf32> -> vector<8x48xf32>
    %cst_78 = arith.constant dense<0.000000e+00> : vector<8x128xf32>
    %275 = tpu.matmul %274, %4, %cst_78 {dimension_numbers = #tpu.dot_dimension_numbers<[1], [0], [0], [1], [0, 0, 1, 1], [], []>} : vector<8x48xf32>, vector<48x128xf32>, vector<8x128xf32> -> vector<8x128xf32>
    %276 = arith.addf %275, %10 : vector<8x128xf32>
    %277 = arith.negf %276 : vector<8x128xf32>
    %278 = math.exp %277 : vector<8x128xf32>
    %cst_79 = arith.constant 1.000000e+00 : f32
    %279 = vector.broadcast %cst_79 : f32 to vector<8x128xf32>
    %280 = arith.addf %279, %278 : vector<8x128xf32>
    %281 = arith.divf %279, %280 : vector<8x128xf32>
    %282 = vector.extract_strided_slice %281 {offsets = [0, 0], sizes = [8, 32], strides = [1, 1]} : vector<8x128xf32> to vector<8x32xf32>
    %283 = vector.extract_strided_slice %281 {offsets = [0, 32], sizes = [8, 32], strides = [1, 1]} : vector<8x128xf32> to vector<8x32xf32>
    %284 = vector.extract_strided_slice %281 {offsets = [0, 64], sizes = [8, 32], strides = [1, 1]} : vector<8x128xf32> to vector<8x32xf32>
    %cst_80 = arith.constant 2.000000e+00 : f32
    %285 = vector.broadcast %cst_80 : f32 to vector<8x32xf32>
    %286 = arith.mulf %285, %284 : vector<8x32xf32>
    %cst_81 = arith.constant 1.000000e+00 : f32
    %287 = vector.broadcast %cst_81 : f32 to vector<8x32xf32>
    %288 = arith.subf %286, %287 : vector<8x32xf32>
    %289 = vector.extract_strided_slice %281 {offsets = [0, 96], sizes = [8, 32], strides = [1, 1]} : vector<8x128xf32> to vector<8x32xf32>
    %290 = arith.mulf %283, %245 : vector<8x32xf32>
    %291 = arith.mulf %282, %288 : vector<8x32xf32>
    %292 = arith.addf %290, %291 : vector<8x32xf32>
    %293 = math.tanh %292 : vector<8x32xf32>
    %294 = arith.mulf %289, %293 : vector<8x32xf32>
    %295 = math.tanh %294 : vector<8x32xf32>
    %c40 = arith.constant 40 : index
    %c0_82 = arith.constant 0 : index
    %296 = vector.load %arg10[%c40, %c0_82] : memref<64x32xf32, #tpu.memory_space<vmem>>, vector<8x32xf32>
    tpu.vector_store %arg10[%c40, %c0_82], %295 {strides = array<i32>} : memref<64x32xf32, #tpu.memory_space<vmem>>, vector<8x32xf32>,
    %c6 = arith.constant 6 : index
    %c0_83 = arith.constant 0 : index
    %c0_84 = arith.constant 0 : index
    %297 = vector.load %arg2[%c6, %c0_83, %c0_84] : memref<8x8x8xf32, #tpu.memory_space<vmem>>, vector<1x8x8xf32>
    %298 = vector.shape_cast %297 : vector<1x8x8xf32> to vector<8x8xf32>
    %299 = tpu.concatenate %298, %272 in 1 : vector<8x8xf32>, vector<8x16xf32> -> vector<8x24xf32>
    %cst_85 = arith.constant dense<0.000000e+00> : vector<8x64xf32>
    %300 = tpu.matmul %299, %3, %cst_85 {dimension_numbers = #tpu.dot_dimension_numbers<[1], [0], [0], [1], [0, 0, 1, 1], [], []>} : vector<8x24xf32>, vector<24x64xf32>, vector<8x64xf32> -> vector<8x64xf32>
    %301 = arith.addf %300, %7 : vector<8x64xf32>
    %302 = arith.negf %301 : vector<8x64xf32>
    %303 = math.exp %302 : vector<8x64xf32>
    %cst_86 = arith.constant 1.000000e+00 : f32
    %304 = vector.broadcast %cst_86 : f32 to vector<8x64xf32>
    %305 = arith.addf %304, %303 : vector<8x64xf32>
    %306 = arith.divf %304, %305 : vector<8x64xf32>
    %307 = vector.extract_strided_slice %306 {offsets = [0, 0], sizes = [8, 16], strides = [1, 1]} : vector<8x64xf32> to vector<8x16xf32>
    %308 = vector.extract_strided_slice %306 {offsets = [0, 16], sizes = [8, 16], strides = [1, 1]} : vector<8x64xf32> to vector<8x16xf32>
    %309 = vector.extract_strided_slice %306 {offsets = [0, 32], sizes = [8, 16], strides = [1, 1]} : vector<8x64xf32> to vector<8x16xf32>
    %cst_87 = arith.constant 2.000000e+00 : f32
    %310 = vector.broadcast %cst_87 : f32 to vector<8x16xf32>
    %311 = arith.mulf %310, %309 : vector<8x16xf32>
    %cst_88 = arith.constant 1.000000e+00 : f32
    %312 = vector.broadcast %cst_88 : f32 to vector<8x16xf32>
    %313 = arith.subf %311, %312 : vector<8x16xf32>
    %314 = vector.extract_strided_slice %306 {offsets = [0, 48], sizes = [8, 16], strides = [1, 1]} : vector<8x64xf32> to vector<8x16xf32>
    %315 = arith.mulf %308, %270 : vector<8x16xf32>
    %316 = arith.mulf %307, %313 : vector<8x16xf32>
    %317 = arith.addf %315, %316 : vector<8x16xf32>
    %318 = math.tanh %317 : vector<8x16xf32>
    %319 = arith.mulf %314, %318 : vector<8x16xf32>
    %320 = math.tanh %319 : vector<8x16xf32>
    %321 = tpu.concatenate %320, %294 in 1 : vector<8x16xf32>, vector<8x32xf32> -> vector<8x48xf32>
    %cst_89 = arith.constant dense<0.000000e+00> : vector<8x128xf32>
    %322 = tpu.matmul %321, %4, %cst_89 {dimension_numbers = #tpu.dot_dimension_numbers<[1], [0], [0], [1], [0, 0, 1, 1], [], []>} : vector<8x48xf32>, vector<48x128xf32>, vector<8x128xf32> -> vector<8x128xf32>
    %323 = arith.addf %322, %10 : vector<8x128xf32>
    %324 = arith.negf %323 : vector<8x128xf32>
    %325 = math.exp %324 : vector<8x128xf32>
    %cst_90 = arith.constant 1.000000e+00 : f32
    %326 = vector.broadcast %cst_90 : f32 to vector<8x128xf32>
    %327 = arith.addf %326, %325 : vector<8x128xf32>
    %328 = arith.divf %326, %327 : vector<8x128xf32>
    %329 = vector.extract_strided_slice %328 {offsets = [0, 0], sizes = [8, 32], strides = [1, 1]} : vector<8x128xf32> to vector<8x32xf32>
    %330 = vector.extract_strided_slice %328 {offsets = [0, 32], sizes = [8, 32], strides = [1, 1]} : vector<8x128xf32> to vector<8x32xf32>
    %331 = vector.extract_strided_slice %328 {offsets = [0, 64], sizes = [8, 32], strides = [1, 1]} : vector<8x128xf32> to vector<8x32xf32>
    %cst_91 = arith.constant 2.000000e+00 : f32
    %332 = vector.broadcast %cst_91 : f32 to vector<8x32xf32>
    %333 = arith.mulf %332, %331 : vector<8x32xf32>
    %cst_92 = arith.constant 1.000000e+00 : f32
    %334 = vector.broadcast %cst_92 : f32 to vector<8x32xf32>
    %335 = arith.subf %333, %334 : vector<8x32xf32>
    %336 = vector.extract_strided_slice %328 {offsets = [0, 96], sizes = [8, 32], strides = [1, 1]} : vector<8x128xf32> to vector<8x32xf32>
    %337 = arith.mulf %330, %292 : vector<8x32xf32>
    %338 = arith.mulf %329, %335 : vector<8x32xf32>
    %339 = arith.addf %337, %338 : vector<8x32xf32>
    %340 = math.tanh %339 : vector<8x32xf32>
    %341 = arith.mulf %336, %340 : vector<8x32xf32>
    %342 = math.tanh %341 : vector<8x32xf32>
    %c48 = arith.constant 48 : index
    %c0_93 = arith.constant 0 : index
    %343 = vector.load %arg10[%c48, %c0_93] : memref<64x32xf32, #tpu.memory_space<vmem>>, vector<8x32xf32>
    tpu.vector_store %arg10[%c48, %c0_93], %342 {strides = array<i32>} : memref<64x32xf32, #tpu.memory_space<vmem>>, vector<8x32xf32>,
    %c7 = arith.constant 7 : index
    %c0_94 = arith.constant 0 : index
    %c0_95 = arith.constant 0 : index
    %344 = vector.load %arg2[%c7, %c0_94, %c0_95] : memref<8x8x8xf32, #tpu.memory_space<vmem>>, vector<1x8x8xf32>
    %345 = vector.shape_cast %344 : vector<1x8x8xf32> to vector<8x8xf32>
    %346 = tpu.concatenate %345, %319 in 1 : vector<8x8xf32>, vector<8x16xf32> -> vector<8x24xf32>
    %cst_96 = arith.constant dense<0.000000e+00> : vector<8x64xf32>
    %347 = tpu.matmul %346, %3, %cst_96 {dimension_numbers = #tpu.dot_dimension_numbers<[1], [0], [0], [1], [0, 0, 1, 1], [], []>} : vector<8x24xf32>, vector<24x64xf32>, vector<8x64xf32> -> vector<8x64xf32>
    %348 = arith.addf %347, %7 : vector<8x64xf32>
    %349 = arith.negf %348 : vector<8x64xf32>
    %350 = math.exp %349 : vector<8x64xf32>
    %cst_97 = arith.constant 1.000000e+00 : f32
    %351 = vector.broadcast %cst_97 : f32 to vector<8x64xf32>
    %352 = arith.addf %351, %350 : vector<8x64xf32>
    %353 = arith.divf %351, %352 : vector<8x64xf32>
    %354 = vector.extract_strided_slice %353 {offsets = [0, 0], sizes = [8, 16], strides = [1, 1]} : vector<8x64xf32> to vector<8x16xf32>
    %355 = vector.extract_strided_slice %353 {offsets = [0, 16], sizes = [8, 16], strides = [1, 1]} : vector<8x64xf32> to vector<8x16xf32>
    %356 = vector.extract_strided_slice %353 {offsets = [0, 32], sizes = [8, 16], strides = [1, 1]} : vector<8x64xf32> to vector<8x16xf32>
    %cst_98 = arith.constant 2.000000e+00 : f32
    %357 = vector.broadcast %cst_98 : f32 to vector<8x16xf32>
    %358 = arith.mulf %357, %356 : vector<8x16xf32>
    %cst_99 = arith.constant 1.000000e+00 : f32
    %359 = vector.broadcast %cst_99 : f32 to vector<8x16xf32>
    %360 = arith.subf %358, %359 : vector<8x16xf32>
    %361 = vector.extract_strided_slice %353 {offsets = [0, 48], sizes = [8, 16], strides = [1, 1]} : vector<8x64xf32> to vector<8x16xf32>
    %362 = arith.mulf %355, %317 : vector<8x16xf32>
    %363 = arith.mulf %354, %360 : vector<8x16xf32>
    %364 = arith.addf %362, %363 : vector<8x16xf32>
    %365 = math.tanh %364 : vector<8x16xf32>
    %366 = arith.mulf %361, %365 : vector<8x16xf32>
    %367 = math.tanh %366 : vector<8x16xf32>
    %368 = tpu.concatenate %367, %341 in 1 : vector<8x16xf32>, vector<8x32xf32> -> vector<8x48xf32>
    %cst_100 = arith.constant dense<0.000000e+00> : vector<8x128xf32>
    %369 = tpu.matmul %368, %4, %cst_100 {dimension_numbers = #tpu.dot_dimension_numbers<[1], [0], [0], [1], [0, 0, 1, 1], [], []>} : vector<8x48xf32>, vector<48x128xf32>, vector<8x128xf32> -> vector<8x128xf32>
    %370 = arith.addf %369, %10 : vector<8x128xf32>
    %371 = arith.negf %370 : vector<8x128xf32>
    %372 = math.exp %371 : vector<8x128xf32>
    %cst_101 = arith.constant 1.000000e+00 : f32
    %373 = vector.broadcast %cst_101 : f32 to vector<8x128xf32>
    %374 = arith.addf %373, %372 : vector<8x128xf32>
    %375 = arith.divf %373, %374 : vector<8x128xf32>
    %376 = vector.extract_strided_slice %375 {offsets = [0, 0], sizes = [8, 32], strides = [1, 1]} : vector<8x128xf32> to vector<8x32xf32>
    %377 = vector.extract_strided_slice %375 {offsets = [0, 32], sizes = [8, 32], strides = [1, 1]} : vector<8x128xf32> to vector<8x32xf32>
    %378 = vector.extract_strided_slice %375 {offsets = [0, 64], sizes = [8, 32], strides = [1, 1]} : vector<8x128xf32> to vector<8x32xf32>
    %cst_102 = arith.constant 2.000000e+00 : f32
    %379 = vector.broadcast %cst_102 : f32 to vector<8x32xf32>
    %380 = arith.mulf %379, %378 : vector<8x32xf32>
    %cst_103 = arith.constant 1.000000e+00 : f32
    %381 = vector.broadcast %cst_103 : f32 to vector<8x32xf32>
    %382 = arith.subf %380, %381 : vector<8x32xf32>
    %383 = vector.extract_strided_slice %375 {offsets = [0, 96], sizes = [8, 32], strides = [1, 1]} : vector<8x128xf32> to vector<8x32xf32>
    %384 = arith.mulf %377, %339 : vector<8x32xf32>
    %385 = arith.mulf %376, %382 : vector<8x32xf32>
    %386 = arith.addf %384, %385 : vector<8x32xf32>
    %387 = math.tanh %386 : vector<8x32xf32>
    %388 = arith.mulf %383, %387 : vector<8x32xf32>
    %389 = math.tanh %388 : vector<8x32xf32>
    %c56 = arith.constant 56 : index
    %c0_104 = arith.constant 0 : index
    %390 = vector.load %arg10[%c56, %c0_104] : memref<64x32xf32, #tpu.memory_space<vmem>>, vector<8x32xf32>
    tpu.vector_store %arg10[%c56, %c0_104], %389 {strides = array<i32>} : memref<64x32xf32, #tpu.memory_space<vmem>>, vector<8x32xf32>,
    %c0_105 = arith.constant 0 : index
    %c0_106 = arith.constant 0 : index
    %391 = vector.load %arg11[%c0_105, %c0_106] : memref<8x16xf32, #tpu.memory_space<vmem>>, vector<8x16xf32>
    tpu.vector_store %arg11[%c0_105, %c0_106], %366 {strides = array<i32>} : memref<8x16xf32, #tpu.memory_space<vmem>>, vector<8x16xf32>,
    %c0_107 = arith.constant 0 : index
    %c0_108 = arith.constant 0 : index
    %392 = vector.load %arg12[%c0_107, %c0_108] : memref<8x16xf32, #tpu.memory_space<vmem>>, vector<8x16xf32>
    tpu.vector_store %arg12[%c0_107, %c0_108], %364 {strides = array<i32>} : memref<8x16xf32, #tpu.memory_space<vmem>>, vector<8x16xf32>,
    %c0_109 = arith.constant 0 : index
    %c0_110 = arith.constant 0 : index
    %393 = vector.load %arg13[%c0_109, %c0_110] : memref<8x32xf32, #tpu.memory_space<vmem>>, vector<8x32xf32>
    tpu.vector_store %arg13[%c0_109, %c0_110], %388 {strides = array<i32>} : memref<8x32xf32, #tpu.memory_space<vmem>>, vector<8x32xf32>,
    %c0_111 = arith.constant 0 : index
    %c0_112 = arith.constant 0 : index
    %394 = vector.load %arg14[%c0_111, %c0_112] : memref<8x32xf32, #tpu.memory_space<vmem>>, vector<8x32xf32>
    tpu.vector_store %arg14[%c0_111, %c0_112], %386 {strides = array<i32>} : memref<8x32xf32, #tpu.memory_space<vmem>>, vector<8x32xf32>,
    %c0_113 = arith.constant 0 : index
    %c0_114 = arith.constant 0 : index
    %395 = vector.load %arg10[%c0_113, %c0_114] : memref<64x32xf32, #tpu.memory_space<vmem>>, vector<64x32xf32>
    %c0_115 = arith.constant 0 : index
    %c0_116 = arith.constant 0 : index
    %396 = vector.load %arg7[%c0_115, %c0_116] : memref<32x128xf32, #tpu.memory_space<vmem>>, vector<32x128xf32>
    %cst_117 = arith.constant dense<0.000000e+00> : vector<64x128xf32>
    %397 = tpu.matmul %395, %396, %cst_117 {dimension_numbers = #tpu.dot_dimension_numbers<[1], [0], [0], [1], [0, 0, 1, 1], [], []>} : vector<64x32xf32>, vector<32x128xf32>, vector<64x128xf32> -> vector<64x128xf32>
    %c0_118 = arith.constant 0 : index
    %c0_119 = arith.constant 0 : index
    %398 = vector.load %arg8[%c0_118, %c0_119] : memref<1x128xf32, #tpu.memory_space<vmem>>, vector<1x128xf32>
    %399 = vector.broadcast %398 : vector<1x128xf32> to vector<64x128xf32>
    %400 = arith.addf %397, %399 : vector<64x128xf32>
    %401 = math.tanh %400 : vector<64x128xf32>
    %402 = vector.extract_strided_slice %401 {offsets = [0, 0], sizes = [8, 128], strides = [1, 1]} : vector<64x128xf32> to vector<8x128xf32>
    %c0_120 = arith.constant 0 : index
    %c0_121 = arith.constant 0 : index
    %c0_122 = arith.constant 0 : index
    %403 = vector.load %arg9[%c0_120, %c0_121, %c0_122] : memref<8x8x128xf32, #tpu.memory_space<vmem>>, vector<1x8x128xf32>
    %404 = vector.shape_cast %403 : vector<1x8x128xf32> to vector<8x128xf32>
    %405 = vector.shape_cast %402 : vector<8x128xf32> to vector<1x8x128xf32>
    tpu.vector_store %arg9[%c0_120, %c0_121, %c0_122], %405 {strides = array<i32>} : memref<8x8x128xf32, #tpu.memory_space<vmem>>, vector<1x8x128xf32>,
    %406 = vector.extract_strided_slice %401 {offsets = [8, 0], sizes = [8, 128], strides = [1, 1]} : vector<64x128xf32> to vector<8x128xf32>
    %c1_123 = arith.constant 1 : index
    %c0_124 = arith.constant 0 : index
    %c0_125 = arith.constant 0 : index
    %407 = vector.load %arg9[%c1_123, %c0_124, %c0_125] : memref<8x8x128xf32, #tpu.memory_space<vmem>>, vector<1x8x128xf32>
    %408 = vector.shape_cast %407 : vector<1x8x128xf32> to vector<8x128xf32>
    %409 = vector.shape_cast %406 : vector<8x128xf32> to vector<1x8x128xf32>
    tpu.vector_store %arg9[%c1_123, %c0_124, %c0_125], %409 {strides = array<i32>} : memref<8x8x128xf32, #tpu.memory_space<vmem>>, vector<1x8x128xf32>,
    %410 = vector.extract_strided_slice %401 {offsets = [16, 0], sizes = [8, 128], strides = [1, 1]} : vector<64x128xf32> to vector<8x128xf32>
    %c2_126 = arith.constant 2 : index
    %c0_127 = arith.constant 0 : index
    %c0_128 = arith.constant 0 : index
    %411 = vector.load %arg9[%c2_126, %c0_127, %c0_128] : memref<8x8x128xf32, #tpu.memory_space<vmem>>, vector<1x8x128xf32>
    %412 = vector.shape_cast %411 : vector<1x8x128xf32> to vector<8x128xf32>
    %413 = vector.shape_cast %410 : vector<8x128xf32> to vector<1x8x128xf32>
    tpu.vector_store %arg9[%c2_126, %c0_127, %c0_128], %413 {strides = array<i32>} : memref<8x8x128xf32, #tpu.memory_space<vmem>>, vector<1x8x128xf32>,
    %414 = vector.extract_strided_slice %401 {offsets = [24, 0], sizes = [8, 128], strides = [1, 1]} : vector<64x128xf32> to vector<8x128xf32>
    %c3_129 = arith.constant 3 : index
    %c0_130 = arith.constant 0 : index
    %c0_131 = arith.constant 0 : index
    %415 = vector.load %arg9[%c3_129, %c0_130, %c0_131] : memref<8x8x128xf32, #tpu.memory_space<vmem>>, vector<1x8x128xf32>
    %416 = vector.shape_cast %415 : vector<1x8x128xf32> to vector<8x128xf32>
    %417 = vector.shape_cast %414 : vector<8x128xf32> to vector<1x8x128xf32>
    tpu.vector_store %arg9[%c3_129, %c0_130, %c0_131], %417 {strides = array<i32>} : memref<8x8x128xf32, #tpu.memory_space<vmem>>, vector<1x8x128xf32>,
    %418 = vector.extract_strided_slice %401 {offsets = [32, 0], sizes = [8, 128], strides = [1, 1]} : vector<64x128xf32> to vector<8x128xf32>
    %c4_132 = arith.constant 4 : index
    %c0_133 = arith.constant 0 : index
    %c0_134 = arith.constant 0 : index
    %419 = vector.load %arg9[%c4_132, %c0_133, %c0_134] : memref<8x8x128xf32, #tpu.memory_space<vmem>>, vector<1x8x128xf32>
    %420 = vector.shape_cast %419 : vector<1x8x128xf32> to vector<8x128xf32>
    %421 = vector.shape_cast %418 : vector<8x128xf32> to vector<1x8x128xf32>
    tpu.vector_store %arg9[%c4_132, %c0_133, %c0_134], %421 {strides = array<i32>} : memref<8x8x128xf32, #tpu.memory_space<vmem>>, vector<1x8x128xf32>,
    %422 = vector.extract_strided_slice %401 {offsets = [40, 0], sizes = [8, 128], strides = [1, 1]} : vector<64x128xf32> to vector<8x128xf32>
    %c5_135 = arith.constant 5 : index
    %c0_136 = arith.constant 0 : index
    %c0_137 = arith.constant 0 : index
    %423 = vector.load %arg9[%c5_135, %c0_136, %c0_137] : memref<8x8x128xf32, #tpu.memory_space<vmem>>, vector<1x8x128xf32>
    %424 = vector.shape_cast %423 : vector<1x8x128xf32> to vector<8x128xf32>
    %425 = vector.shape_cast %422 : vector<8x128xf32> to vector<1x8x128xf32>
    tpu.vector_store %arg9[%c5_135, %c0_136, %c0_137], %425 {strides = array<i32>} : memref<8x8x128xf32, #tpu.memory_space<vmem>>, vector<1x8x128xf32>,
    %426 = vector.extract_strided_slice %401 {offsets = [48, 0], sizes = [8, 128], strides = [1, 1]} : vector<64x128xf32> to vector<8x128xf32>
    %c6_138 = arith.constant 6 : index
    %c0_139 = arith.constant 0 : index
    %c0_140 = arith.constant 0 : index
    %427 = vector.load %arg9[%c6_138, %c0_139, %c0_140] : memref<8x8x128xf32, #tpu.memory_space<vmem>>, vector<1x8x128xf32>
    %428 = vector.shape_cast %427 : vector<1x8x128xf32> to vector<8x128xf32>
    %429 = vector.shape_cast %426 : vector<8x128xf32> to vector<1x8x128xf32>
    tpu.vector_store %arg9[%c6_138, %c0_139, %c0_140], %429 {strides = array<i32>} : memref<8x8x128xf32, #tpu.memory_space<vmem>>, vector<1x8x128xf32>,
    %430 = vector.extract_strided_slice %401 {offsets = [56, 0], sizes = [8, 128], strides = [1, 1]} : vector<64x128xf32> to vector<8x128xf32>
    %c7_141 = arith.constant 7 : index
    %c0_142 = arith.constant 0 : index
    %c0_143 = arith.constant 0 : index
    %431 = vector.load %arg9[%c7_141, %c0_142, %c0_143] : memref<8x8x128xf32, #tpu.memory_space<vmem>>, vector<1x8x128xf32>
    %432 = vector.shape_cast %431 : vector<1x8x128xf32> to vector<8x128xf32>
    %433 = vector.shape_cast %430 : vector<8x128xf32> to vector<1x8x128xf32>
    tpu.vector_store %arg9[%c7_141, %c0_142, %c0_143], %433 {strides = array<i32>} : memref<8x8x128xf32, #tpu.memory_space<vmem>>, vector<1x8x128xf32>,
    return
  }
  func.func @transform_0(%arg0: i32, %arg1: i32) -> (i32, i32, i32) {
    %c0_i32 = arith.constant 0 : i32
    %c0_i32_0 = arith.constant 0 : i32
    return %arg1, %arg0, %c0_i32 : i32, i32, i32
  }
  func.func @transform_1(%arg0: i32, %arg1: i32) -> (i32, i32) {
    %c0_i32 = arith.constant 0 : i32
    %c0_i32_0 = arith.constant 0 : i32
    %c0_i32_1 = arith.constant 0 : i32
    return %c0_i32, %c0_i32_0 : i32, i32
  }
  func.func @transform_2(%arg0: i32, %arg1: i32) -> (i32, i32) {
    %c0_i32 = arith.constant 0 : i32
    %c0_i32_0 = arith.constant 0 : i32
    %c0_i32_1 = arith.constant 0 : i32
    return %c0_i32, %c0_i32_0 : i32, i32
  }
  func.func @transform_3(%arg0: i32, %arg1: i32) -> (i32, i32) {
    %c0_i32 = arith.constant 0 : i32
    %c0_i32_0 = arith.constant 0 : i32
    %c0_i32_1 = arith.constant 0 : i32
    return %c0_i32, %c0_i32_0 : i32, i32
  }
  func.func @transform_4(%arg0: i32, %arg1: i32) -> (i32, i32) {
    %c0_i32 = arith.constant 0 : i32
    %c0_i32_0 = arith.constant 0 : i32
    %c0_i32_1 = arith.constant 0 : i32
    return %c0_i32, %c0_i32_0 : i32, i32
  }
  func.func @transform_5(%arg0: i32, %arg1: i32) -> (i32, i32) {
    %c0_i32 = arith.constant 0 : i32
    %c0_i32_0 = arith.constant 0 : i32
    %c0_i32_1 = arith.constant 0 : i32
    return %c0_i32, %c0_i32_0 : i32, i32
  }
  func.func @transform_6(%arg0: i32, %arg1: i32) -> (i32, i32) {
    %c0_i32 = arith.constant 0 : i32
    %c0_i32_0 = arith.constant 0 : i32
    %c0_i32_1 = arith.constant 0 : i32
    return %c0_i32, %c0_i32_0 : i32, i32
  }
  func.func @transform_7(%arg0: i32, %arg1: i32) -> (i32, i32, i32) {
    %c0_i32 = arith.constant 0 : i32
    %c0_i32_0 = arith.constant 0 : i32
    return %arg1, %arg0, %c0_i32 : i32, i32, i32
  }
}

</mosaic_0001>

<llo_original>
// kernel: tpu_custom_call.1
$region0: #{tpu_custom_call.1}
  #allocation0 [shape = 'u32[]', space=smem, size = 0x4, offset = 0x4, fixed_abs, tag = 'smem constant byte address 0x4 - core index']
  #allocation1 [shape = 'u32[72,128]{1,0:T(1,128)}', space=vmem, size = 0x9000, scoped, tag = 'internal scratch']
  #allocation2 [shape = 'f32[64,32]{1,0:T(8,128)}', space=vmem, size = 0x8000, scoped, tag = 'scratch operand']
  #allocation3 [shape = 'f32[8,16]{1,0:T(8,128)}', space=vmem, size = 0x1000, scoped, tag = 'scratch operand']
  #allocation4 [shape = 'f32[8,16]{1,0:T(8,128)}', space=vmem, size = 0x1000, scoped, tag = 'scratch operand']
  #allocation5 [shape = 'f32[8,32]{1,0:T(8,128)}', space=vmem, size = 0x1000, scoped, tag = 'scratch operand']
  #allocation6 [shape = 'f32[8,32]{1,0:T(8,128)}', space=vmem, size = 0x1000, scoped, tag = 'scratch operand']
  %s0 = inlined_call_operand.hbm [shape: f32[8,8,8], index: 0, kind: input, shape index: {}]
  %s1 = inlined_call_operand.hbm [shape: f32[24,64], index: 1, kind: input, shape index: {}]
  %s2 = inlined_call_operand.vmem [shape: f32[1,64], index: 2, kind: input, shape index: {}]
  %s3 = inlined_call_operand.hbm [shape: f32[48,128], index: 3, kind: input, shape index: {}]
  %s4 = inlined_call_operand.vmem [shape: f32[1,128], index: 4, kind: input, shape index: {}]
  %s5 = inlined_call_operand.hbm [shape: f32[32,128], index: 5, kind: input, shape index: {}]
  %s6 = inlined_call_operand.vmem [shape: f32[1,128], index: 6, kind: input, shape index: {}]
  %s7 = inlined_call_operand.hbm [shape: f32[8,8,128], index: 7, kind: output, shape index: {}]
  %s8 = sld [smem:[#allocation0]]
  $region58: #{tpu_custom_call.1} parent=0
    _
  %s10 = ssub.s32 1, %s8
  %s11 = scalar_select 0, %s10, %s8
  $region1: #{tpu_custom_call.1} parent=0
    #allocation7 [shape = 'u8[32768]{0}', space=vmem, size = 0x8000, scoped, tag = 'input window, operand 0, single buffered']
    #allocation8 [shape = 's32[1]{0}', space=sflag, size = 0x4, scoped, tag = 'scoped memory for tpu_custom_call.1']
    #allocation9 [shape = 's32[1]{0}', space=sflag, size = 0x4, scoped, tag = 'scoped memory for tpu_custom_call.1']
    #allocation10 [shape = 'u8[12288]{0}', space=vmem, size = 0x3000, scoped, tag = 'input window, operand 1, single buffered']
    #allocation11 [shape = 's32[1]{0}', space=sflag, size = 0x4, scoped, tag = 'scoped memory for tpu_custom_call.1']
    #allocation12 [shape = 'u8[24576]{0}', space=vmem, size = 0x6000, scoped, tag = 'input window, operand 3, single buffered']
    #allocation13 [shape = 'u8[16384]{0}', space=vmem, size = 0x4000, scoped, tag = 'input window, operand 5, single buffered']
    #allocation14 [shape = 's32[1]{0}', space=sflag, size = 0x4, scoped, tag = 'scoped memory for tpu_custom_call.1']
    #allocation15 [shape = 'u8[32768]{0}', space=vmem, size = 0x8000, scoped, tag = 'output window, operand 0, single buffered']
    %12 = vsyncpa [#allocation8], 0
    %13 = vsyncpa [#allocation11], 0
    %14 = vsyncpa [#allocation14], 0
    %15 = vsyncpa [#allocation9], 0
    // Predicated region
    $region2: #{tpu_custom_call.1} parent=1 // pred_check
      _
    $region3: #{tpu_custom_call.1} parent=1 // pred_check_branch
      %17 = sbr.rel (0) target = $region5
    $region4: #{tpu_custom_call.1} parent=1 // pred_region
      %19 = vsyncadd [#allocation8], 0
      %s20 = sshll.u32 %s0, 4
      %s21 = int_to_ptr.hbm [resolvable:$true] %s20
      %s22 = sshll.u32 [#allocation7], 4
      %s23 = int_to_ptr.vmem [resolvable:$true] %s22
      %28 = dma.hbm_to_vmem [thread:$0]  %s21, 1024, %s23, [#allocation8], 128, 128, 8
    $region5: #{tpu_custom_call.1} parent=1 // pred_fallthru
      _
    // Predicated region
    $region6: #{tpu_custom_call.1} parent=1 // pred_check
      _
    $region7: #{tpu_custom_call.1} parent=1 // pred_check_branch
      %30 = sbr.rel (0) target = $region9
    $region8: #{tpu_custom_call.1} parent=1 // pred_region
      %32 = vsyncadd [#allocation11], 0
      %s33 = sshll.u32 %s1, 4
      %s34 = int_to_ptr.hbm [resolvable:$true] %s33
      %s35 = sshll.u32 [#allocation10], 4
      %s36 = int_to_ptr.vmem [resolvable:$true] %s35
      %41 = dma.hbm_to_vmem [thread:$0]  %s34, 384, %s36, [#allocation11], 128, 128, 8
    $region9: #{tpu_custom_call.1} parent=1 // pred_fallthru
      _
    // Predicated region
    $region10: #{tpu_custom_call.1} parent=1 // pred_check
      _
    $region11: #{tpu_custom_call.1} parent=1 // pred_check_branch
      %43 = sbr.rel (0) target = $region13
    $region12: #{tpu_custom_call.1} parent=1 // pred_region
      _
    $region13: #{tpu_custom_call.1} parent=1 // pred_fallthru
      _
    // Predicated region
    $region14: #{tpu_custom_call.1} parent=1 // pred_check
      _
    $region15: #{tpu_custom_call.1} parent=1 // pred_check_branch
      %45 = sbr.rel (0) target = $region17
    $region16: #{tpu_custom_call.1} parent=1 // pred_region
      %47 = vsyncadd [#allocation11], 0
      %s48 = sshll.u32 %s3, 4
      %s49 = int_to_ptr.hbm [resolvable:$true] %s48
      %s50 = sshll.u32 [#allocation12], 4
      %s51 = int_to_ptr.vmem [resolvable:$true] %s50
      %56 = dma.hbm_to_vmem [thread:$0]  %s49, 768, %s51, [#allocation11], 128, 128, 8
    $region17: #{tpu_custom_call.1} parent=1 // pred_fallthru
      _
    // Predicated region
    $region18: #{tpu_custom_call.1} parent=1 // pred_check
      _
    $region19: #{tpu_custom_call.1} parent=1 // pred_check_branch
      %58 = sbr.rel (0) target = $region21
    $region20: #{tpu_custom_call.1} parent=1 // pred_region
      _
    $region21: #{tpu_custom_call.1} parent=1 // pred_fallthru
      _
    // Predicated region
    $region22: #{tpu_custom_call.1} parent=1 // pred_check
      _
    $region23: #{tpu_custom_call.1} parent=1 // pred_check_branch
      %60 = sbr.rel (0) target = $region25
    $region24: #{tpu_custom_call.1} parent=1 // pred_region
      %62 = vsyncadd [#allocation14], 0
      %s63 = sshll.u32 %s5, 4
      %s64 = int_to_ptr.hbm [resolvable:$true] %s63
      %s65 = sshll.u32 [#allocation13], 4
      %s66 = int_to_ptr.vmem [resolvable:$true] %s65
      %71 = dma.hbm_to_vmem [thread:$0]  %s64, 512, %s66, [#allocation14], 128, 128, 8
    $region25: #{tpu_custom_call.1} parent=1 // pred_fallthru
      _
    // Predicated region
    $region26: #{tpu_custom_call.1} parent=1 // pred_check
      _
    $region27: #{tpu_custom_call.1} parent=1 // pred_check_branch
      %73 = sbr.rel (0) target = $region29
    $region28: #{tpu_custom_call.1} parent=1 // pred_region
      _
    $region29: #{tpu_custom_call.1} parent=1 // pred_fallthru
      _
    // Predicated region
    $region30: #{tpu_custom_call.1} parent=1 // pred_check
      _
    $region31: #{tpu_custom_call.1} parent=1 // pred_check_branch
      %75 = sbr.rel (0) target = $region33
    $region32: #{tpu_custom_call.1} parent=1 // pred_region
      %77 = dma.done [#allocation8], 1024
    $region33: #{tpu_custom_call.1} parent=1 // pred_fallthru
      _
    // Predicated region
    $region34: #{tpu_custom_call.1} parent=1 // pred_check
      _
    $region35: #{tpu_custom_call.1} parent=1 // pred_check_branch
      %79 = sbr.rel (0) target = $region37
    $region36: #{tpu_custom_call.1} parent=1 // pred_region
      %81 = dma.done [#allocation11], 384
    $region37: #{tpu_custom_call.1} parent=1 // pred_fallthru
      _
    // Predicated region
    $region38: #{tpu_custom_call.1} parent=1 // pred_check
      _
    $region39: #{tpu_custom_call.1} parent=1 // pred_check_branch
      %83 = sbr.rel (0) target = $region41
    $region40: #{tpu_custom_call.1} parent=1 // pred_region
      %85 = dma.done [#allocation11], 768
    $region41: #{tpu_custom_call.1} parent=1 // pred_fallthru
      _
    // Predicated region
    $region42: #{tpu_custom_call.1} parent=1 // pred_check
      _
    $region43: #{tpu_custom_call.1} parent=1 // pred_check_branch
      %87 = sbr.rel (0) target = $region45
    $region44: #{tpu_custom_call.1} parent=1 // pred_region
      %89 = dma.done [#allocation14], 512
    $region45: #{tpu_custom_call.1} parent=1 // pred_fallthru
      _
    %p90 = scmp.eq.s32.totalorder 0, 0
    // Predicated region
    $region46: #{tpu_custom_call.1} parent=1 // pred_check
      %p91 = pneg %p90
    $region47: #{tpu_custom_call.1} parent=1 // pred_check_branch
      %93 = sbr.rel (%p91) target = $region49
    $region48: #{tpu_custom_call.1} parent=1 // pred_region
      %vm94 = vcmask 130048
      %95 = vst.msk [vmem:[#allocation3] sm:$0xff] %vm94, 0.0
      %96 = vst.msk [vmem:[#allocation4] sm:$0xff] %vm94, 0.0
      %vm97 = vcmask 261120
      %98 = vst.msk [vmem:[#allocation5] sm:$0xff] %vm97, 0.0
      %99 = vst.msk [vmem:[#allocation6] sm:$0xff] %vm97, 0.0
    $region49: #{tpu_custom_call.1} parent=1 // pred_fallthru
      _
    %v100 = vld [vmem:[#allocation10] sm:$0xff]
    %v101 = vld [vmem:[#allocation10 + $0x8] sm:$0xff]
    %v102 = vld [vmem:[#allocation10 + $0x10] sm:$0xff]
    %v103 = vld [vmem:[#allocation12] sm:$0xff]
    %v104 = vld [vmem:[#allocation12 + $0x8] sm:$0xff]
    %v105 = vld [vmem:[#allocation12 + $0x10] sm:$0xff]
    %v106 = vld [vmem:[#allocation12 + $0x18] sm:$0xff]
    %v107 = vld [vmem:[#allocation12 + $0x20] sm:$0xff]
    %v108 = vld [vmem:[#allocation12 + $0x28] sm:$0xff]
    %v109 = vld [vmem:[%s2] sm:$0x1]
    %v111 = vperm.slane %v109, 0
    %v113 = vld [vmem:[%s4] sm:$0x1]
    %v115 = vperm.slane %v113, 0
    %v117 = vld [vmem:[#allocation3] sm:$0xff]
    %v118 = vld [vmem:[#allocation4] sm:$0xff]
    %v119 = vld [vmem:[#allocation5] sm:$0xff]
    %v120 = vld [vmem:[#allocation6] sm:$0xff]
    %v121 = vld [vmem:[#allocation7] sm:$0xff]
    %123 = vrot.lane.b32.xlu0 %v117, 8
    %v124 = vpop.permute.xlu0 %123
    %vm126 = vcmask 64512
    %v127 = vsel %vm126, %v121, %v124
    %vm128 = vcmask 195584
    %v130 = vsel %vm128, %v127, 0
    %132 = vmatpush.msra.mxu0 0.0
    %133 = vmatpush.msra.mxu0 0.0
    %134 = vmatpush.msra.mxu0 0.0
    %135 = vmatpush.msra.mxu0 0.0
    %136 = vmatpush.msra.mxu0 0.0
    %137 = vmatpush.msra.mxu0 0.0
    %138 = vmatpush.msra.mxu0 0.0
    %139 = vmatpush.msra.mxu0 0.0
    %140 = vmatpush.msra.mxu0 0.0
    %141 = vmatpush.msra.mxu0 0.0
    %142 = vmatpush.msra.mxu0 0.0
    %143 = vmatpush.msra.mxu0 0.0
    %144 = vmatpush.msra.mxu0 0.0
    %145 = vmatpush.msra.mxu0 %v102
    %146 = vmatpush.msra.mxu0 %v101
    %147 = vmatpush.msra.mxu0 %v100
    %148 = vmatmul.f32.gmra.mxu0 %v130
    %v149 = vpop.f32.mrf.mxu0
    %v150 = vadd.f32 %v111, %v149
    %151 = vdwg.mxu0
    %v152 = vxor.u32 %v150, 2147483648
    %v153 = vmul.f32 %v152, 1.442695
    %v154 = vpow.pop %v153
    %v155 = vadd.f32 %v154, 1.0
    %v156 = vrcp.pop %v155
    %v157 = vmul.f32 %v155, %v156
    %v158 = vsub.f32 1.0, %v157
    %v159 = vmul.f32 %v156, %v158
    %v160 = vadd.f32 %v156, %v159
    %vm161 = vweird.f32 %v155
    %vm162 = vweird.f32 %v156
    %vm163 = vmor %vm161, %vm162
    %v164 = vsel %vm163, %v156, %v160
    %v165 = vand.u32 2147483647, %v155
    %vm166 = vcmp.eq.f32.partialorder %v165, 8.507059e+37
    %v167 = vand.u32 %v155, 2147483648
    %v168 = vor.u32 1.1754944e-38, %v167
    %v169 = vsel %vm166, %v168, %v164
    %v170 = vmul.f32 1.0, %v169
    %v171 = vmul.f32 %v170, 2.0
    %v172 = vsub.f32 %v171, 1.0
    %174 = vrot.lane.b32.xlu0 %v118, 16
    %v175 = vpop.permute.xlu0 %174
    %v177 = vmul.f32 %v170, %v175
    %179 = vrot.lane.b32.xlu0 %v172, 96
    %v180 = vpop.permute.xlu0 %179
    %v182 = vmul.f32 %v170, %v180
    %184 = vrot.lane.b32.xlu0 %v182, 16
    %v185 = vpop.permute.xlu0 %184
    %v187 = vadd.f32 %v177, %v185
    %v188 = vtanh.pop %v187
    %190 = vrot.lane.b32.xlu0 %v188, 32
    %v191 = vpop.permute.xlu0 %190
    %v193 = vmul.f32 %v170, %v191
    %v194 = vtanh.pop %v193
    %196 = vrot.lane.b32.xlu0 %v194, 80
    %v197 = vpop.permute.xlu0 %196
    %200 = vrot.lane.b32.xlu0 %v119, 16
    %v201 = vpop.permute.xlu0 %200
    %vm203 = vcmask 130048
    %v204 = vsel %vm203, %v197, %v201
    %vm205 = vcmask 392192
    %v207 = vsel %vm205, %v204, 0
    %209 = vmatpush.msra.mxu0 0.0
    %210 = vmatpush.msra.mxu0 0.0
    %211 = vmatpush.msra.mxu0 0.0
    %212 = vmatpush.msra.mxu0 0.0
    %213 = vmatpush.msra.mxu0 0.0
    %214 = vmatpush.msra.mxu0 0.0
    %215 = vmatpush.msra.mxu0 0.0
    %216 = vmatpush.msra.mxu0 0.0
    %217 = vmatpush.msra.mxu0 0.0
    %218 = vmatpush.msra.mxu0 0.0
    %219 = vmatpush.msra.mxu0 %v108
    %220 = vmatpush.msra.mxu0 %v107
    %221 = vmatpush.msra.mxu0 %v106
    %222 = vmatpush.msra.mxu0 %v105
    %223 = vmatpush.msra.mxu0 %v104
    %224 = vmatpush.msra.mxu0 %v103
    %225 = vmatmul.f32.gmra.mxu0 %v207
    %v226 = vpop.f32.mrf.mxu0
    %v227 = vadd.f32 %v115, %v226
    %228 = vdwg.mxu0
    %v229 = vxor.u32 %v227, 2147483648
    %v230 = vmul.f32 %v229, 1.442695
    %v231 = vpow.pop %v230
    %v232 = vadd.f32 %v231, 1.0
    %v233 = vrcp.pop %v232
    %v234 = vmul.f32 %v232, %v233
    %v235 = vsub.f32 1.0, %v234
    %v236 = vmul.f32 %v233, %v235
    %v237 = vadd.f32 %v233, %v236
    %vm238 = vweird.f32 %v232
    %vm239 = vweird.f32 %v233
    %vm240 = vmor %vm238, %vm239
    %v241 = vsel %vm240, %v233, %v237
    %v242 = vand.u32 2147483647, %v232
    %vm243 = vcmp.eq.f32.partialorder %v242, 8.507059e+37
    %v244 = vand.u32 %v232, 2147483648
    %v245 = vor.u32 1.1754944e-38, %v244
    %v246 = vsel %vm243, %v245, %v241
    %v247 = vmul.f32 1.0, %v246
    %v248 = vmul.f32 %v247, 2.0
    %v249 = vsub.f32 %v248, 1.0
    %251 = vrot.lane.b32.xlu0 %v120, 32
    %v252 = vpop.permute.xlu0 %251
    %v254 = vmul.f32 %v247, %v252
    %256 = vrot.lane.b32.xlu0 %v249, 64
    %v257 = vpop.permute.xlu0 %256
    %v259 = vmul.f32 %v247, %v257
    %261 = vrot.lane.b32.xlu0 %v259, 32
    %v262 = vpop.permute.xlu0 %261
    %v264 = vadd.f32 %v254, %v262
    %v265 = vtanh.pop %v264
    %267 = vrot.lane.b32.xlu0 %v265, 64
    %v268 = vpop.permute.xlu0 %267
    %v270 = vmul.f32 %v247, %v268
    %v271 = vtanh.pop %v270
    %273 = vrot.lane.b32.xlu0 %v271, 32
    %v274 = vpop.permute.xlu0 %273
    %vm276 = vcmask 261120
    %277 = vst.msk [vmem:[#allocation2] sm:$0xff] %vm276, %v274
    %s278 = scalar_lea.vmem [#allocation7], 8
    %v279 = vld [vmem:[%s278] sm:$0xff]
    %281 = vrot.lane.b32.xlu0 %v193, 88
    %v282 = vpop.permute.xlu0 %281
    %v284 = vsel %vm126, %v279, %v282
    %v286 = vsel %vm128, %v284, 0
    %288 = vmatpush.msra.mxu0 0.0
    %289 = vmatpush.msra.mxu0 0.0
    %290 = vmatpush.msra.mxu0 0.0
    %291 = vmatpush.msra.mxu0 0.0
    %292 = vmatpush.msra.mxu0 0.0
    %293 = vmatpush.msra.mxu0 0.0
    %294 = vmatpush.msra.mxu0 0.0
    %295 = vmatpush.msra.mxu0 0.0
    %296 = vmatpush.msra.mxu0 0.0
    %297 = vmatpush.msra.mxu0 0.0
    %298 = vmatpush.msra.mxu0 0.0
    %299 = vmatpush.msra.mxu0 0.0
    %300 = vmatpush.msra.mxu0 0.0
    %301 = vmatpush.msra.mxu0 %v102
    %302 = vmatpush.msra.mxu0 %v101
    %303 = vmatpush.msra.mxu0 %v100
    %304 = vmatmul.f32.gmra.mxu0 %v286
    %v305 = vpop.f32.mrf.mxu0
    %v306 = vadd.f32 %v111, %v305
    %307 = vdwg.mxu0
    %v308 = vxor.u32 %v306, 2147483648
    %v309 = vmul.f32 %v308, 1.442695
    %v310 = vpow.pop %v309
    %v311 = vadd.f32 %v310, 1.0
    %v312 = vrcp.pop %v311
    %v313 = vmul.f32 %v311, %v312
    %v314 = vsub.f32 1.0, %v313
    %v315 = vmul.f32 %v312, %v314
    %v316 = vadd.f32 %v312, %v315
    %vm317 = vweird.f32 %v311
    %vm318 = vweird.f32 %v312
    %vm319 = vmor %vm317, %vm318
    %v320 = vsel %vm319, %v312, %v316
    %v321 = vand.u32 2147483647, %v311
    %vm322 = vcmp.eq.f32.partialorder %v321, 8.507059e+37
    %v323 = vand.u32 %v311, 2147483648
    %v324 = vor.u32 1.1754944e-38, %v323
    %v325 = vsel %vm322, %v324, %v320
    %v326 = vmul.f32 1.0, %v325
    %v327 = vmul.f32 %v326, 2.0
    %v328 = vsub.f32 %v327, 1.0
    %v329 = vmul.f32 %v326, %v187
    %331 = vrot.lane.b32.xlu0 %v328, 96
    %v332 = vpop.permute.xlu0 %331
    %v334 = vmul.f32 %v326, %v332
    %336 = vrot.lane.b32.xlu0 %v334, 16
    %v337 = vpop.permute.xlu0 %336
    %v339 = vadd.f32 %v329, %v337
    %v340 = vtanh.pop %v339
    %342 = vrot.lane.b32.xlu0 %v340, 32
    %v343 = vpop.permute.xlu0 %342
    %v345 = vmul.f32 %v326, %v343
    %v346 = vtanh.pop %v345
    %348 = vrot.lane.b32.xlu0 %v346, 80
    %v349 = vpop.permute.xlu0 %348
    %352 = vrot.lane.b32.xlu0 %v270, 48
    %v353 = vpop.permute.xlu0 %352
    %v355 = vsel %vm203, %v349, %v353
    %v357 = vsel %vm205, %v355, 0
    %359 = vmatpush.msra.mxu0 0.0
    %360 = vmatpush.msra.mxu0 0.0
    %361 = vmatpush.msra.mxu0 0.0
    %362 = vmatpush.msra.mxu0 0.0
    %363 = vmatpush.msra.mxu0 0.0
    %364 = vmatpush.msra.mxu0 0.0
    %365 = vmatpush.msra.mxu0 0.0
    %366 = vmatpush.msra.mxu0 0.0
    %367 = vmatpush.msra.mxu0 0.0
    %368 = vmatpush.msra.mxu0 0.0
    %369 = vmatpush.msra.mxu0 %v108
    %370 = vmatpush.msra.mxu0 %v107
    %371 = vmatpush.msra.mxu0 %v106
    %372 = vmatpush.msra.mxu0 %v105
    %373 = vmatpush.msra.mxu0 %v104
    %374 = vmatpush.msra.mxu0 %v103
    %375 = vmatmul.f32.gmra.mxu0 %v357
    %v376 = vpop.f32.mrf.mxu0
    %v377 = vadd.f32 %v115, %v376
    %378 = vdwg.mxu0
    %v379 = vxor.u32 %v377, 2147483648
    %v380 = vmul.f32 %v379, 1.442695
    %v381 = vpow.pop %v380
    %v382 = vadd.f32 %v381, 1.0
    %v383 = vrcp.pop %v382
    %v384 = vmul.f32 %v382, %v383
    %v385 = vsub.f32 1.0, %v384
    %v386 = vmul.f32 %v383, %v385
    %v387 = vadd.f32 %v383, %v386
    %vm388 = vweird.f32 %v382
    %vm389 = vweird.f32 %v383
    %vm390 = vmor %vm388, %vm389
    %v391 = vsel %vm390, %v383, %v387
    %v392 = vand.u32 2147483647, %v382
    %vm393 = vcmp.eq.f32.partialorder %v392, 8.507059e+37
    %v394 = vand.u32 %v382, 2147483648
    %v395 = vor.u32 1.1754944e-38, %v394
    %v396 = vsel %vm393, %v395, %v391
    %v397 = vmul.f32 1.0, %v396
    %v398 = vmul.f32 %v397, 2.0
    %v399 = vsub.f32 %v398, 1.0
    %v400 = vmul.f32 %v397, %v264
    %402 = vrot.lane.b32.xlu0 %v399, 64
    %v403 = vpop.permute.xlu0 %402
    %v405 = vmul.f32 %v397, %v403
    %407 = vrot.lane.b32.xlu0 %v405, 32
    %v408 = vpop.permute.xlu0 %407
    %v410 = vadd.f32 %v400, %v408
    %v411 = vtanh.pop %v410
    %413 = vrot.lane.b32.xlu0 %v411, 64
    %v414 = vpop.permute.xlu0 %413
    %v416 = vmul.f32 %v397, %v414
    %v417 = vtanh.pop %v416
    %419 = vrot.lane.b32.xlu0 %v417, 32
    %v420 = vpop.permute.xlu0 %419
    %422 = vst.msk [vmem:[#allocation2 + $0x8] sm:$0xff] %vm276, %v420
    %s423 = scalar_lea.vmem [#allocation7], 16
    %v424 = vld [vmem:[%s423] sm:$0xff]
    %426 = vrot.lane.b32.xlu0 %v345, 88
    %v427 = vpop.permute.xlu0 %426
    %v429 = vsel %vm126, %v424, %v427
    %v431 = vsel %vm128, %v429, 0
    %433 = vmatpush.msra.mxu0 0.0
    %434 = vmatpush.msra.mxu0 0.0
    %435 = vmatpush.msra.mxu0 0.0
    %436 = vmatpush.msra.mxu0 0.0
    %437 = vmatpush.msra.mxu0 0.0
    %438 = vmatpush.msra.mxu0 0.0
    %439 = vmatpush.msra.mxu0 0.0
    %440 = vmatpush.msra.mxu0 0.0
    %441 = vmatpush.msra.mxu0 0.0
    %442 = vmatpush.msra.mxu0 0.0
    %443 = vmatpush.msra.mxu0 0.0
    %444 = vmatpush.msra.mxu0 0.0
    %445 = vmatpush.msra.mxu0 0.0
    %446 = vmatpush.msra.mxu0 %v102
    %447 = vmatpush.msra.mxu0 %v101
    %448 = vmatpush.msra.mxu0 %v100
    %449 = vmatmul.f32.gmra.mxu0 %v431
    %v450 = vpop.f32.mrf.mxu0
    %v451 = vadd.f32 %v111, %v450
    %452 = vdwg.mxu0
    %v453 = vxor.u32 %v451, 2147483648
    %v454 = vmul.f32 %v453, 1.442695
    %v455 = vpow.pop %v454
    %v456 = vadd.f32 %v455, 1.0
    %v457 = vrcp.pop %v456
    %v458 = vmul.f32 %v456, %v457
    %v459 = vsub.f32 1.0, %v458
    %v460 = vmul.f32 %v457, %v459
    %v461 = vadd.f32 %v457, %v460
    %vm462 = vweird.f32 %v456
    %vm463 = vweird.f32 %v457
    %vm464 = vmor %vm462, %vm463
    %v465 = vsel %vm464, %v457, %v461
    %v466 = vand.u32 2147483647, %v456
    %vm467 = vcmp.eq.f32.partialorder %v466, 8.507059e+37
    %v468 = vand.u32 %v456, 2147483648
    %v469 = vor.u32 1.1754944e-38, %v468
    %v470 = vsel %vm467, %v469, %v465
    %v471 = vmul.f32 1.0, %v470
    %v472 = vmul.f32 %v471, 2.0
    %v473 = vsub.f32 %v472, 1.0
    %v474 = vmul.f32 %v471, %v339
    %476 = vrot.lane.b32.xlu0 %v473, 96
    %v477 = vpop.permute.xlu0 %476
    %v479 = vmul.f32 %v471, %v477
    %481 = vrot.lane.b32.xlu0 %v479, 16
    %v482 = vpop.permute.xlu0 %481
    %v484 = vadd.f32 %v474, %v482
    %v485 = vtanh.pop %v484
    %487 = vrot.lane.b32.xlu0 %v485, 32
    %v488 = vpop.permute.xlu0 %487
    %v490 = vmul.f32 %v471, %v488
    %v491 = vtanh.pop %v490
    %493 = vrot.lane.b32.xlu0 %v491, 80
    %v494 = vpop.permute.xlu0 %493
    %497 = vrot.lane.b32.xlu0 %v416, 48
    %v498 = vpop.permute.xlu0 %497
    %v500 = vsel %vm203, %v494, %v498
    %v502 = vsel %vm205, %v500, 0
    %504 = vmatpush.msra.mxu0 0.0
    %505 = vmatpush.msra.mxu0 0.0
    %506 = vmatpush.msra.mxu0 0.0
    %507 = vmatpush.msra.mxu0 0.0
    %508 = vmatpush.msra.mxu0 0.0
    %509 = vmatpush.msra.mxu0 0.0
    %510 = vmatpush.msra.mxu0 0.0
    %511 = vmatpush.msra.mxu0 0.0
    %512 = vmatpush.msra.mxu0 0.0
    %513 = vmatpush.msra.mxu0 0.0
    %514 = vmatpush.msra.mxu0 %v108
    %515 = vmatpush.msra.mxu0 %v107
    %516 = vmatpush.msra.mxu0 %v106
    %517 = vmatpush.msra.mxu0 %v105
    %518 = vmatpush.msra.mxu0 %v104
    %519 = vmatpush.msra.mxu0 %v103
    %520 = vmatmul.f32.gmra.mxu0 %v502
    %v521 = vpop.f32.mrf.mxu0
    %v522 = vadd.f32 %v115, %v521
    %523 = vdwg.mxu0
    %v524 = vxor.u32 %v522, 2147483648
    %v525 = vmul.f32 %v524, 1.442695
    %v526 = vpow.pop %v525
    %v527 = vadd.f32 %v526, 1.0
    %v528 = vrcp.pop %v527
    %v529 = vmul.f32 %v527, %v528
    %v530 = vsub.f32 1.0, %v529
    %v531 = vmul.f32 %v528, %v530
    %v532 = vadd.f32 %v528, %v531
    %vm533 = vweird.f32 %v527
    %vm534 = vweird.f32 %v528
    %vm535 = vmor %vm533, %vm534
    %v536 = vsel %vm535, %v528, %v532
    %v537 = vand.u32 2147483647, %v527
    %vm538 = vcmp.eq.f32.partialorder %v537, 8.507059e+37
    %v539 = vand.u32 %v527, 2147483648
    %v540 = vor.u32 1.1754944e-38, %v539
    %v541 = vsel %vm538, %v540, %v536
    %v542 = vmul.f32 1.0, %v541
    %v543 = vmul.f32 %v542, 2.0
    %v544 = vsub.f32 %v543, 1.0
    %v545 = vmul.f32 %v542, %v410
    %547 = vrot.lane.b32.xlu0 %v544, 64
    %v548 = vpop.permute.xlu0 %547
    %v550 = vmul.f32 %v542, %v548
    %552 = vrot.lane.b32.xlu0 %v550, 32
    %v553 = vpop.permute.xlu0 %552
    %v555 = vadd.f32 %v545, %v553
    %v556 = vtanh.pop %v555
    %558 = vrot.lane.b32.xlu0 %v556, 64
    %v559 = vpop.permute.xlu0 %558
    %v561 = vmul.f32 %v542, %v559
    %v562 = vtanh.pop %v561
    %564 = vrot.lane.b32.xlu0 %v562, 32
    %v565 = vpop.permute.xlu0 %564
    %567 = vst.msk [vmem:[#allocation2 + $0x10] sm:$0xff] %vm276, %v565
    %s568 = scalar_lea.vmem [#allocation7], 24
    %v569 = vld [vmem:[%s568] sm:$0xff]
    %571 = vrot.lane.b32.xlu0 %v490, 88
    %v572 = vpop.permute.xlu0 %571
    %v574 = vsel %vm126, %v569, %v572
    %v576 = vsel %vm128, %v574, 0
    %578 = vmatpush.msra.mxu0 0.0
    %579 = vmatpush.msra.mxu0 0.0
    %580 = vmatpush.msra.mxu0 0.0
    %581 = vmatpush.msra.mxu0 0.0
    %582 = vmatpush.msra.mxu0 0.0
    %583 = vmatpush.msra.mxu0 0.0
    %584 = vmatpush.msra.mxu0 0.0
    %585 = vmatpush.msra.mxu0 0.0
    %586 = vmatpush.msra.mxu0 0.0
    %587 = vmatpush.msra.mxu0 0.0
    %588 = vmatpush.msra.mxu0 0.0
    %589 = vmatpush.msra.mxu0 0.0
    %590 = vmatpush.msra.mxu0 0.0
    %591 = vmatpush.msra.mxu0 %v102
    %592 = vmatpush.msra.mxu0 %v101
    %593 = vmatpush.msra.mxu0 %v100
    %594 = vmatmul.f32.gmra.mxu0 %v576
    %v595 = vpop.f32.mrf.mxu0
    %v596 = vadd.f32 %v111, %v595
    %597 = vdwg.mxu0
    %v598 = vxor.u32 %v596, 2147483648
    %v599 = vmul.f32 %v598, 1.442695
    %v600 = vpow.pop %v599
    %v601 = vadd.f32 %v600, 1.0
    %v602 = vrcp.pop %v601
    %v603 = vmul.f32 %v601, %v602
    %v604 = vsub.f32 1.0, %v603
    %v605 = vmul.f32 %v602, %v604
    %v606 = vadd.f32 %v602, %v605
    %vm607 = vweird.f32 %v601
    %vm608 = vweird.f32 %v602
    %vm609 = vmor %vm607, %vm608
    %v610 = vsel %vm609, %v602, %v606
    %v611 = vand.u32 2147483647, %v601
    %vm612 = vcmp.eq.f32.partialorder %v611, 8.507059e+37
    %v613 = vand.u32 %v601, 2147483648
    %v614 = vor.u32 1.1754944e-38, %v613
    %v615 = vsel %vm612, %v614, %v610
    %v616 = vmul.f32 1.0, %v615
    %v617 = vmul.f32 %v616, 2.0
    %v618 = vsub.f32 %v617, 1.0
    %v619 = vmul.f32 %v616, %v484
    %621 = vrot.lane.b32.xlu0 %v618, 96
    %v622 = vpop.permute.xlu0 %621
    %v624 = vmul.f32 %v616, %v622
    %626 = vrot.lane.b32.xlu0 %v624, 16
    %v627 = vpop.permute.xlu0 %626
    %v629 = vadd.f32 %v619, %v627
    %v630 = vtanh.pop %v629
    %632 = vrot.lane.b32.xlu0 %v630, 32
    %v633 = vpop.permute.xlu0 %632
    %v635 = vmul.f32 %v616, %v633
    %v636 = vtanh.pop %v635
    %638 = vrot.lane.b32.xlu0 %v636, 80
    %v639 = vpop.permute.xlu0 %638
    %642 = vrot.lane.b32.xlu0 %v561, 48
    %v643 = vpop.permute.xlu0 %642
    %v645 = vsel %vm203, %v639, %v643
    %v647 = vsel %vm205, %v645, 0
    %649 = vmatpush.msra.mxu0 0.0
    %650 = vmatpush.msra.mxu0 0.0
    %651 = vmatpush.msra.mxu0 0.0
    %652 = vmatpush.msra.mxu0 0.0
    %653 = vmatpush.msra.mxu0 0.0
    %654 = vmatpush.msra.mxu0 0.0
    %655 = vmatpush.msra.mxu0 0.0
    %656 = vmatpush.msra.mxu0 0.0
    %657 = vmatpush.msra.mxu0 0.0
    %658 = vmatpush.msra.mxu0 0.0
    %659 = vmatpush.msra.mxu0 %v108
    %660 = vmatpush.msra.mxu0 %v107
    %661 = vmatpush.msra.mxu0 %v106
    %662 = vmatpush.msra.mxu0 %v105
    %663 = vmatpush.msra.mxu0 %v104
    %664 = vmatpush.msra.mxu0 %v103
    %665 = vmatmul.f32.gmra.mxu0 %v647
    %v666 = vpop.f32.mrf.mxu0
    %v667 = vadd.f32 %v115, %v666
    %668 = vdwg.mxu0
    %v669 = vxor.u32 %v667, 2147483648
    %v670 = vmul.f32 %v669, 1.442695
    %v671 = vpow.pop %v670
    %v672 = vadd.f32 %v671, 1.0
    %v673 = vrcp.pop %v672
    %v674 = vmul.f32 %v672, %v673
    %v675 = vsub.f32 1.0, %v674
    %v676 = vmul.f32 %v673, %v675
    %v677 = vadd.f32 %v673, %v676
    %vm678 = vweird.f32 %v672
    %vm679 = vweird.f32 %v673
    %vm680 = vmor %vm678, %vm679
    %v681 = vsel %vm680, %v673, %v677
    %v682 = vand.u32 2147483647, %v672
    %vm683 = vcmp.eq.f32.partialorder %v682, 8.507059e+37
    %v684 = vand.u32 %v672, 2147483648
    %v685 = vor.u32 1.1754944e-38, %v684
    %v686 = vsel %vm683, %v685, %v681
    %v687 = vmul.f32 1.0, %v686
    %v688 = vmul.f32 %v687, 2.0
    %v689 = vsub.f32 %v688, 1.0
    %v690 = vmul.f32 %v687, %v555
    %692 = vrot.lane.b32.xlu0 %v689, 64
    %v693 = vpop.permute.xlu0 %692
    %v695 = vmul.f32 %v687, %v693
    %697 = vrot.lane.b32.xlu0 %v695, 32
    %v698 = vpop.permute.xlu0 %697
    %v700 = vadd.f32 %v690, %v698
    %v701 = vtanh.pop %v700
    %703 = vrot.lane.b32.xlu0 %v701, 64
    %v704 = vpop.permute.xlu0 %703
    %v706 = vmul.f32 %v687, %v704
    %v707 = vtanh.pop %v706
    %709 = vrot.lane.b32.xlu0 %v707, 32
    %v710 = vpop.permute.xlu0 %709
    %712 = vst.msk [vmem:[#allocation2 + $0x18] sm:$0xff] %vm276, %v710
    %s713 = scalar_lea.vmem [#allocation7], 32
    %v714 = vld [vmem:[%s713] sm:$0xff]
    %716 = vrot.lane.b32.xlu0 %v635, 88
    %v717 = vpop.permute.xlu0 %716
    %v719 = vsel %vm126, %v714, %v717
    %v721 = vsel %vm128, %v719, 0
    %723 = vmatpush.msra.mxu0 0.0
    %724 = vmatpush.msra.mxu0 0.0
    %725 = vmatpush.msra.mxu0 0.0
    %726 = vmatpush.msra.mxu0 0.0
    %727 = vmatpush.msra.mxu0 0.0
    %728 = vmatpush.msra.mxu0 0.0
    %729 = vmatpush.msra.mxu0 0.0
    %730 = vmatpush.msra.mxu0 0.0
    %731 = vmatpush.msra.mxu0 0.0
    %732 = vmatpush.msra.mxu0 0.0
    %733 = vmatpush.msra.mxu0 0.0
    %734 = vmatpush.msra.mxu0 0.0
    %735 = vmatpush.msra.mxu0 0.0
    %736 = vmatpush.msra.mxu0 %v102
    %737 = vmatpush.msra.mxu0 %v101
    %738 = vmatpush.msra.mxu0 %v100
    %739 = vmatmul.f32.gmra.mxu0 %v721
    %v740 = vpop.f32.mrf.mxu0
    %v741 = vadd.f32 %v111, %v740
    %742 = vdwg.mxu0
    %v743 = vxor.u32 %v741, 2147483648
    %v744 = vmul.f32 %v743, 1.442695
    %v745 = vpow.pop %v744
    %v746 = vadd.f32 %v745, 1.0
    %v747 = vrcp.pop %v746
    %v748 = vmul.f32 %v746, %v747
    %v749 = vsub.f32 1.0, %v748
    %v750 = vmul.f32 %v747, %v749
    %v751 = vadd.f32 %v747, %v750
    %vm752 = vweird.f32 %v746
    %vm753 = vweird.f32 %v747
    %vm754 = vmor %vm752, %vm753
    %v755 = vsel %vm754, %v747, %v751
    %v756 = vand.u32 2147483647, %v746
    %vm757 = vcmp.eq.f32.partialorder %v756, 8.507059e+37
    %v758 = vand.u32 %v746, 2147483648
    %v759 = vor.u32 1.1754944e-38, %v758
    %v760 = vsel %vm757, %v759, %v755
    %v761 = vmul.f32 1.0, %v760
    %v762 = vmul.f32 %v761, 2.0
    %v763 = vsub.f32 %v762, 1.0
    %v764 = vmul.f32 %v761, %v629
    %766 = vrot.lane.b32.xlu0 %v763, 96
    %v767 = vpop.permute.xlu0 %766
    %v769 = vmul.f32 %v761, %v767
    %771 = vrot.lane.b32.xlu0 %v769, 16
    %v772 = vpop.permute.xlu0 %771
    %v774 = vadd.f32 %v764, %v772
    %v775 = vtanh.pop %v774
    %777 = vrot.lane.b32.xlu0 %v775, 32
    %v778 = vpop.permute.xlu0 %777
    %v780 = vmul.f32 %v761, %v778
    %v781 = vtanh.pop %v780
    %783 = vrot.lane.b32.xlu0 %v781, 80
    %v784 = vpop.permute.xlu0 %783
    %787 = vrot.lane.b32.xlu0 %v706, 48
    %v788 = vpop.permute.xlu0 %787
    %v790 = vsel %vm203, %v784, %v788
    %v792 = vsel %vm205, %v790, 0
    %794 = vmatpush.msra.mxu0 0.0
    %795 = vmatpush.msra.mxu0 0.0
    %796 = vmatpush.msra.mxu0 0.0
    %797 = vmatpush.msra.mxu0 0.0
    %798 = vmatpush.msra.mxu0 0.0
    %799 = vmatpush.msra.mxu0 0.0
    %800 = vmatpush.msra.mxu0 0.0
    %801 = vmatpush.msra.mxu0 0.0
    %802 = vmatpush.msra.mxu0 0.0
    %803 = vmatpush.msra.mxu0 0.0
    %804 = vmatpush.msra.mxu0 %v108
    %805 = vmatpush.msra.mxu0 %v107
    %806 = vmatpush.msra.mxu0 %v106
    %807 = vmatpush.msra.mxu0 %v105
    %808 = vmatpush.msra.mxu0 %v104
    %809 = vmatpush.msra.mxu0 %v103
    %810 = vmatmul.f32.gmra.mxu0 %v792
    %v811 = vpop.f32.mrf.mxu0
    %v812 = vadd.f32 %v115, %v811
    %813 = vdwg.mxu0
    %v814 = vxor.u32 %v812, 2147483648
    %v815 = vmul.f32 %v814, 1.442695
    %v816 = vpow.pop %v815
    %v817 = vadd.f32 %v816, 1.0
    %v818 = vrcp.pop %v817
    %v819 = vmul.f32 %v817, %v818
    %v820 = vsub.f32 1.0, %v819
    %v821 = vmul.f32 %v818, %v820
    %v822 = vadd.f32 %v818, %v821
    %vm823 = vweird.f32 %v817
    %vm824 = vweird.f32 %v818
    %vm825 = vmor %vm823, %vm824
    %v826 = vsel %vm825, %v818, %v822
    %v827 = vand.u32 2147483647, %v817
    %vm828 = vcmp.eq.f32.partialorder %v827, 8.507059e+37
    %v829 = vand.u32 %v817, 2147483648
    %v830 = vor.u32 1.1754944e-38, %v829
    %v831 = vsel %vm828, %v830, %v826
    %v832 = vmul.f32 1.0, %v831
    %v833 = vmul.f32 %v832, 2.0
    %v834 = vsub.f32 %v833, 1.0
    %v835 = vmul.f32 %v832, %v700
    %837 = vrot.lane.b32.xlu0 %v834, 64
    %v838 = vpop.permute.xlu0 %837
    %v840 = vmul.f32 %v832, %v838
    %842 = vrot.lane.b32.xlu0 %v840, 32
    %v843 = vpop.permute.xlu0 %842
    %v845 = vadd.f32 %v835, %v843
    %v846 = vtanh.pop %v845
    %848 = vrot.lane.b32.xlu0 %v846, 64
    %v849 = vpop.permute.xlu0 %848
    %v851 = vmul.f32 %v832, %v849
    %v852 = vtanh.pop %v851
    %854 = vrot.lane.b32.xlu0 %v852, 32
    %v855 = vpop.permute.xlu0 %854
    %857 = vst.msk [vmem:[#allocation2 + $0x20] sm:$0xff] %vm276, %v855
    %s858 = scalar_lea.vmem [#allocation7], 40
    %v859 = vld [vmem:[%s858] sm:$0xff]
    %861 = vrot.lane.b32.xlu0 %v780, 88
    %v862 = vpop.permute.xlu0 %861
    %v864 = vsel %vm126, %v859, %v862
    %v866 = vsel %vm128, %v864, 0
    %868 = vmatpush.msra.mxu0 0.0
    %869 = vmatpush.msra.mxu0 0.0
    %870 = vmatpush.msra.mxu0 0.0
    %871 = vmatpush.msra.mxu0 0.0
    %872 = vmatpush.msra.mxu0 0.0
    %873 = vmatpush.msra.mxu0 0.0
    %874 = vmatpush.msra.mxu0 0.0
    %875 = vmatpush.msra.mxu0 0.0
    %876 = vmatpush.msra.mxu0 0.0
    %877 = vmatpush.msra.mxu0 0.0
    %878 = vmatpush.msra.mxu0 0.0
    %879 = vmatpush.msra.mxu0 0.0
    %880 = vmatpush.msra.mxu0 0.0
    %881 = vmatpush.msra.mxu0 %v102
    %882 = vmatpush.msra.mxu0 %v101
    %883 = vmatpush.msra.mxu0 %v100
    %884 = vmatmul.f32.gmra.mxu0 %v866
    %v885 = vpop.f32.mrf.mxu0
    %v886 = vadd.f32 %v111, %v885
    %887 = vdwg.mxu0
    %v888 = vxor.u32 %v886, 2147483648
    %v889 = vmul.f32 %v888, 1.442695
    %v890 = vpow.pop %v889
    %v891 = vadd.f32 %v890, 1.0
    %v892 = vrcp.pop %v891
    %v893 = vmul.f32 %v891, %v892
    %v894 = vsub.f32 1.0, %v893
    %v895 = vmul.f32 %v892, %v894
    %v896 = vadd.f32 %v892, %v895
    %vm897 = vweird.f32 %v891
    %vm898 = vweird.f32 %v892
    %vm899 = vmor %vm897, %vm898
    %v900 = vsel %vm899, %v892, %v896
    %v901 = vand.u32 2147483647, %v891
    %vm902 = vcmp.eq.f32.partialorder %v901, 8.507059e+37
    %v903 = vand.u32 %v891, 2147483648
    %v904 = vor.u32 1.1754944e-38, %v903
    %v905 = vsel %vm902, %v904, %v900
    %v906 = vmul.f32 1.0, %v905
    %v907 = vmul.f32 %v906, 2.0
    %v908 = vsub.f32 %v907, 1.0
    %v909 = vmul.f32 %v906, %v774
    %911 = vrot.lane.b32.xlu0 %v908, 96
    %v912 = vpop.permute.xlu0 %911
    %v914 = vmul.f32 %v906, %v912
    %916 = vrot.lane.b32.xlu0 %v914, 16
    %v917 = vpop.permute.xlu0 %916
    %v919 = vadd.f32 %v909, %v917
    %v920 = vtanh.pop %v919
    %922 = vrot.lane.b32.xlu0 %v920, 32
    %v923 = vpop.permute.xlu0 %922
    %v925 = vmul.f32 %v906, %v923
    %v926 = vtanh.pop %v925
    %928 = vrot.lane.b32.xlu0 %v926, 80
    %v929 = vpop.permute.xlu0 %928
    %932 = vrot.lane.b32.xlu0 %v851, 48
    %v933 = vpop.permute.xlu0 %932
    %v935 = vsel %vm203, %v929, %v933
    %v937 = vsel %vm205, %v935, 0
    %939 = vmatpush.msra.mxu0 0.0
    %940 = vmatpush.msra.mxu0 0.0
    %941 = vmatpush.msra.mxu0 0.0
    %942 = vmatpush.msra.mxu0 0.0
    %943 = vmatpush.msra.mxu0 0.0
    %944 = vmatpush.msra.mxu0 0.0
    %945 = vmatpush.msra.mxu0 0.0
    %946 = vmatpush.msra.mxu0 0.0
    %947 = vmatpush.msra.mxu0 0.0
    %948 = vmatpush.msra.mxu0 0.0
    %949 = vmatpush.msra.mxu0 %v108
    %950 = vmatpush.msra.mxu0 %v107
    %951 = vmatpush.msra.mxu0 %v106
    %952 = vmatpush.msra.mxu0 %v105
    %953 = vmatpush.msra.mxu0 %v104
    %954 = vmatpush.msra.mxu0 %v103
    %955 = vmatmul.f32.gmra.mxu0 %v937
    %v956 = vpop.f32.mrf.mxu0
    %v957 = vadd.f32 %v115, %v956
    %958 = vdwg.mxu0
    %v959 = vxor.u32 %v957, 2147483648
    %v960 = vmul.f32 %v959, 1.442695
    %v961 = vpow.pop %v960
    %v962 = vadd.f32 %v961, 1.0
    %v963 = vrcp.pop %v962
    %v964 = vmul.f32 %v962, %v963
    %v965 = vsub.f32 1.0, %v964
    %v966 = vmul.f32 %v963, %v965
    %v967 = vadd.f32 %v963, %v966
    %vm968 = vweird.f32 %v962
    %vm969 = vweird.f32 %v963
    %vm970 = vmor %vm968, %vm969
    %v971 = vsel %vm970, %v963, %v967
    %v972 = vand.u32 2147483647, %v962
    %vm973 = vcmp.eq.f32.partialorder %v972, 8.507059e+37
    %v974 = vand.u32 %v962, 2147483648
    %v975 = vor.u32 1.1754944e-38, %v974
    %v976 = vsel %vm973, %v975, %v971
    %v977 = vmul.f32 1.0, %v976
    %v978 = vmul.f32 %v977, 2.0
    %v979 = vsub.f32 %v978, 1.0
    %v980 = vmul.f32 %v977, %v845
    %982 = vrot.lane.b32.xlu0 %v979, 64
    %v983 = vpop.permute.xlu0 %982
    %v985 = vmul.f32 %v977, %v983
    %987 = vrot.lane.b32.xlu0 %v985, 32
    %v988 = vpop.permute.xlu0 %987
    %v990 = vadd.f32 %v980, %v988
    %v991 = vtanh.pop %v990
    %993 = vrot.lane.b32.xlu0 %v991, 64
    %v994 = vpop.permute.xlu0 %993
    %v996 = vmul.f32 %v977, %v994
    %v997 = vtanh.pop %v996
    %999 = vrot.lane.b32.xlu0 %v997, 32
    %v1000 = vpop.permute.xlu0 %999
    %1002 = vst.msk [vmem:[#allocation2 + $0x28] sm:$0xff] %vm276, %v1000
    %s1003 = scalar_lea.vmem [#allocation7], 48
    %v1004 = vld [vmem:[%s1003] sm:$0xff]
    %1006 = vrot.lane.b32.xlu0 %v925, 88
    %v1007 = vpop.permute.xlu0 %1006
    %v1009 = vsel %vm126, %v1004, %v1007
    %v1011 = vsel %vm128, %v1009, 0
    %1013 = vmatpush.msra.mxu0 0.0
    %1014 = vmatpush.msra.mxu0 0.0
    %1015 = vmatpush.msra.mxu0 0.0
    %1016 = vmatpush.msra.mxu0 0.0
    %1017 = vmatpush.msra.mxu0 0.0
    %1018 = vmatpush.msra.mxu0 0.0
    %1019 = vmatpush.msra.mxu0 0.0
    %1020 = vmatpush.msra.mxu0 0.0
    %1021 = vmatpush.msra.mxu0 0.0
    %1022 = vmatpush.msra.mxu0 0.0
    %1023 = vmatpush.msra.mxu0 0.0
    %1024 = vmatpush.msra.mxu0 0.0
    %1025 = vmatpush.msra.mxu0 0.0
    %1026 = vmatpush.msra.mxu0 %v102
    %1027 = vmatpush.msra.mxu0 %v101
    %1028 = vmatpush.msra.mxu0 %v100
    %1029 = vmatmul.f32.gmra.mxu0 %v1011
    %v1030 = vpop.f32.mrf.mxu0
    %v1031 = vadd.f32 %v111, %v1030
    %1032 = vdwg.mxu0
    %v1033 = vxor.u32 %v1031, 2147483648
    %v1034 = vmul.f32 %v1033, 1.442695
    %v1035 = vpow.pop %v1034
    %v1036 = vadd.f32 %v1035, 1.0
    %v1037 = vrcp.pop %v1036
    %v1038 = vmul.f32 %v1036, %v1037
    %v1039 = vsub.f32 1.0, %v1038
    %v1040 = vmul.f32 %v1037, %v1039
    %v1041 = vadd.f32 %v1037, %v1040
    %vm1042 = vweird.f32 %v1036
    %vm1043 = vweird.f32 %v1037
    %vm1044 = vmor %vm1042, %vm1043
    %v1045 = vsel %vm1044, %v1037, %v1041
    %v1046 = vand.u32 2147483647, %v1036
    %vm1047 = vcmp.eq.f32.partialorder %v1046, 8.507059e+37
    %v1048 = vand.u32 %v1036, 2147483648
    %v1049 = vor.u32 1.1754944e-38, %v1048
    %v1050 = vsel %vm1047, %v1049, %v1045
    %v1051 = vmul.f32 1.0, %v1050
    %v1052 = vmul.f32 %v1051, 2.0
    %v1053 = vsub.f32 %v1052, 1.0
    %v1054 = vmul.f32 %v1051, %v919
    %1056 = vrot.lane.b32.xlu0 %v1053, 96
    %v1057 = vpop.permute.xlu0 %1056
    %v1059 = vmul.f32 %v1051, %v1057
    %1061 = vrot.lane.b32.xlu0 %v1059, 16
    %v1062 = vpop.permute.xlu0 %1061
    %v1064 = vadd.f32 %v1054, %v1062
    %v1065 = vtanh.pop %v1064
    %1067 = vrot.lane.b32.xlu0 %v1065, 32
    %v1068 = vpop.permute.xlu0 %1067
    %v1070 = vmul.f32 %v1051, %v1068
    %v1071 = vtanh.pop %v1070
    %1073 = vrot.lane.b32.xlu0 %v1071, 80
    %v1074 = vpop.permute.xlu0 %1073
    %1077 = vrot.lane.b32.xlu0 %v996, 48
    %v1078 = vpop.permute.xlu0 %1077
    %v1080 = vsel %vm203, %v1074, %v1078
    %v1082 = vsel %vm205, %v1080, 0
    %1084 = vmatpush.msra.mxu0 0.0
    %1085 = vmatpush.msra.mxu0 0.0
    %1086 = vmatpush.msra.mxu0 0.0
    %1087 = vmatpush.msra.mxu0 0.0
    %1088 = vmatpush.msra.mxu0 0.0
    %1089 = vmatpush.msra.mxu0 0.0
    %1090 = vmatpush.msra.mxu0 0.0
    %1091 = vmatpush.msra.mxu0 0.0
    %1092 = vmatpush.msra.mxu0 0.0
    %1093 = vmatpush.msra.mxu0 0.0
    %1094 = vmatpush.msra.mxu0 %v108
    %1095 = vmatpush.msra.mxu0 %v107
    %1096 = vmatpush.msra.mxu0 %v106
    %1097 = vmatpush.msra.mxu0 %v105
    %1098 = vmatpush.msra.mxu0 %v104
    %1099 = vmatpush.msra.mxu0 %v103
    %1100 = vmatmul.f32.gmra.mxu0 %v1082
    %v1101 = vpop.f32.mrf.mxu0
    %v1102 = vadd.f32 %v115, %v1101
    %1103 = vdwg.mxu0
    %v1104 = vxor.u32 %v1102, 2147483648
    %v1105 = vmul.f32 %v1104, 1.442695
    %v1106 = vpow.pop %v1105
    %v1107 = vadd.f32 %v1106, 1.0
    %v1108 = vrcp.pop %v1107
    %v1109 = vmul.f32 %v1107, %v1108
    %v1110 = vsub.f32 1.0, %v1109
    %v1111 = vmul.f32 %v1108, %v1110
    %v1112 = vadd.f32 %v1108, %v1111
    %vm1113 = vweird.f32 %v1107
    %vm1114 = vweird.f32 %v1108
    %vm1115 = vmor %vm1113, %vm1114
    %v1116 = vsel %vm1115, %v1108, %v1112
    %v1117 = vand.u32 2147483647, %v1107
    %vm1118 = vcmp.eq.f32.partialorder %v1117, 8.507059e+37
    %v1119 = vand.u32 %v1107, 2147483648
    %v1120 = vor.u32 1.1754944e-38, %v1119
    %v1121 = vsel %vm1118, %v1120, %v1116
    %v1122 = vmul.f32 1.0, %v1121
    %v1123 = vmul.f32 %v1122, 2.0
    %v1124 = vsub.f32 %v1123, 1.0
    %v1125 = vmul.f32 %v1122, %v990
    %1127 = vrot.lane.b32.xlu0 %v1124, 64
    %v1128 = vpop.permute.xlu0 %1127
    %v1130 = vmul.f32 %v1122, %v1128
    %1132 = vrot.lane.b32.xlu0 %v1130, 32
    %v1133 = vpop.permute.xlu0 %1132
    %v1135 = vadd.f32 %v1125, %v1133
    %v1136 = vtanh.pop %v1135
    %1138 = vrot.lane.b32.xlu0 %v1136, 64
    %v1139 = vpop.permute.xlu0 %1138
    %v1141 = vmul.f32 %v1122, %v1139
    %v1142 = vtanh.pop %v1141
    %1144 = vrot.lane.b32.xlu0 %v1142, 32
    %v1145 = vpop.permute.xlu0 %1144
    %1147 = vst.msk [vmem:[#allocation2 + $0x30] sm:$0xff] %vm276, %v1145
    %s1148 = scalar_lea.vmem [#allocation7], 56
    %v1149 = vld [vmem:[%s1148] sm:$0xff]
    %1151 = vrot.lane.b32.xlu0 %v1070, 88
    %v1152 = vpop.permute.xlu0 %1151
    %v1154 = vsel %vm126, %v1149, %v1152
    %v1156 = vsel %vm128, %v1154, 0
    %1158 = vmatpush.msra.mxu0 0.0
    %1159 = vmatpush.msra.mxu0 0.0
    %1160 = vmatpush.msra.mxu0 0.0
    %1161 = vmatpush.msra.mxu0 0.0
    %1162 = vmatpush.msra.mxu0 0.0
    %1163 = vmatpush.msra.mxu0 0.0
    %1164 = vmatpush.msra.mxu0 0.0
    %1165 = vmatpush.msra.mxu0 0.0
    %1166 = vmatpush.msra.mxu0 0.0
    %1167 = vmatpush.msra.mxu0 0.0
    %1168 = vmatpush.msra.mxu0 0.0
    %1169 = vmatpush.msra.mxu0 0.0
    %1170 = vmatpush.msra.mxu0 0.0
    %1171 = vmatpush.msra.mxu0 %v102
    %1172 = vmatpush.msra.mxu0 %v101
    %1173 = vmatpush.msra.mxu0 %v100
    %1174 = vmatmul.f32.gmra.mxu0 %v1156
    %v1175 = vpop.f32.mrf.mxu0
    %v1176 = vadd.f32 %v111, %v1175
    %1177 = vdwg.mxu0
    %v1178 = vxor.u32 %v1176, 2147483648
    %v1179 = vmul.f32 %v1178, 1.442695
    %v1180 = vpow.pop %v1179
    %v1181 = vadd.f32 %v1180, 1.0
    %v1182 = vrcp.pop %v1181
    %v1183 = vmul.f32 %v1181, %v1182
    %v1184 = vsub.f32 1.0, %v1183
    %v1185 = vmul.f32 %v1182, %v1184
    %v1186 = vadd.f32 %v1182, %v1185
    %vm1187 = vweird.f32 %v1181
    %vm1188 = vweird.f32 %v1182
    %vm1189 = vmor %vm1187, %vm1188
    %v1190 = vsel %vm1189, %v1182, %v1186
    %v1191 = vand.u32 2147483647, %v1181
    %vm1192 = vcmp.eq.f32.partialorder %v1191, 8.507059e+37
    %v1193 = vand.u32 %v1181, 2147483648
    %v1194 = vor.u32 1.1754944e-38, %v1193
    %v1195 = vsel %vm1192, %v1194, %v1190
    %v1196 = vmul.f32 1.0, %v1195
    %v1197 = vmul.f32 %v1196, 2.0
    %v1198 = vsub.f32 %v1197, 1.0
    %v1199 = vmul.f32 %v1196, %v1064
    %1201 = vrot.lane.b32.xlu0 %v1198, 96
    %v1202 = vpop.permute.xlu0 %1201
    %v1204 = vmul.f32 %v1196, %v1202
    %1206 = vrot.lane.b32.xlu0 %v1204, 16
    %v1207 = vpop.permute.xlu0 %1206
    %v1209 = vadd.f32 %v1199, %v1207
    %v1210 = vtanh.pop %v1209
    %1212 = vrot.lane.b32.xlu0 %v1210, 32
    %v1213 = vpop.permute.xlu0 %1212
    %v1215 = vmul.f32 %v1196, %v1213
    %v1216 = vtanh.pop %v1215
    %1218 = vrot.lane.b32.xlu0 %v1216, 80
    %v1219 = vpop.permute.xlu0 %1218
    %1222 = vrot.lane.b32.xlu0 %v1141, 48
    %v1223 = vpop.permute.xlu0 %1222
    %v1225 = vsel %vm203, %v1219, %v1223
    %v1227 = vsel %vm205, %v1225, 0
    %1229 = vmatpush.msra.mxu0 0.0
    %1230 = vmatpush.msra.mxu0 0.0
    %1231 = vmatpush.msra.mxu0 0.0
    %1232 = vmatpush.msra.mxu0 0.0
    %1233 = vmatpush.msra.mxu0 0.0
    %1234 = vmatpush.msra.mxu0 0.0
    %1235 = vmatpush.msra.mxu0 0.0
    %1236 = vmatpush.msra.mxu0 0.0
    %1237 = vmatpush.msra.mxu0 0.0
    %1238 = vmatpush.msra.mxu0 0.0
    %1239 = vmatpush.msra.mxu0 %v108
    %1240 = vmatpush.msra.mxu0 %v107
    %1241 = vmatpush.msra.mxu0 %v106
    %1242 = vmatpush.msra.mxu0 %v105
    %1243 = vmatpush.msra.mxu0 %v104
    %1244 = vmatpush.msra.mxu0 %v103
    %1245 = vmatmul.f32.gmra.mxu0 %v1227
    %v1246 = vpop.f32.mrf.mxu0
    %v1247 = vadd.f32 %v115, %v1246
    %1248 = vdwg.mxu0
    %v1249 = vxor.u32 %v1247, 2147483648
    %v1250 = vmul.f32 %v1249, 1.442695
    %v1251 = vpow.pop %v1250
    %v1252 = vadd.f32 %v1251, 1.0
    %v1253 = vrcp.pop %v1252
    %v1254 = vmul.f32 %v1252, %v1253
    %v1255 = vsub.f32 1.0, %v1254
    %v1256 = vmul.f32 %v1253, %v1255
    %v1257 = vadd.f32 %v1253, %v1256
    %vm1258 = vweird.f32 %v1252
    %vm1259 = vweird.f32 %v1253
    %vm1260 = vmor %vm1258, %vm1259
    %v1261 = vsel %vm1260, %v1253, %v1257
    %v1262 = vand.u32 2147483647, %v1252
    %vm1263 = vcmp.eq.f32.partialorder %v1262, 8.507059e+37
    %v1264 = vand.u32 %v1252, 2147483648
    %v1265 = vor.u32 1.1754944e-38, %v1264
    %v1266 = vsel %vm1263, %v1265, %v1261
    %v1267 = vmul.f32 1.0, %v1266
    %v1268 = vmul.f32 %v1267, 2.0
    %v1269 = vsub.f32 %v1268, 1.0
    %v1270 = vmul.f32 %v1267, %v1135
    %1272 = vrot.lane.b32.xlu0 %v1269, 64
    %v1273 = vpop.permute.xlu0 %1272
    %v1275 = vmul.f32 %v1267, %v1273
    %1277 = vrot.lane.b32.xlu0 %v1275, 32
    %v1278 = vpop.permute.xlu0 %1277
    %v1280 = vadd.f32 %v1270, %v1278
    %v1281 = vtanh.pop %v1280
    %1283 = vrot.lane.b32.xlu0 %v1281, 64
    %v1284 = vpop.permute.xlu0 %1283
    %v1286 = vmul.f32 %v1267, %v1284
    %v1287 = vtanh.pop %v1286
    %1289 = vrot.lane.b32.xlu0 %v1287, 32
    %v1290 = vpop.permute.xlu0 %1289
    %1292 = vst.msk [vmem:[#allocation2 + $0x38] sm:$0xff] %vm276, %v1290
    %1294 = vrot.lane.b32.xlu0 %v1215, 80
    %v1295 = vpop.permute.xlu0 %1294
    %1297 = vst.msk [vmem:[#allocation3] sm:$0xff] %vm203, %v1295
    %1299 = vrot.lane.b32.xlu0 %v1209, 112
    %v1300 = vpop.permute.xlu0 %1299
    %1302 = vst.msk [vmem:[#allocation4] sm:$0xff] %vm203, %v1300
    %1304 = vrot.lane.b32.xlu0 %v1286, 32
    %v1305 = vpop.permute.xlu0 %1304
    %1307 = vst.msk [vmem:[#allocation5] sm:$0xff] %vm276, %v1305
    %1309 = vrot.lane.b32.xlu0 %v1280, 96
    %v1310 = vpop.permute.xlu0 %1309
    %1312 = vst.msk [vmem:[#allocation6] sm:$0xff] %vm276, %v1310
    %v1313 = vld [vmem:[#allocation2] sm:$0xff]
    %v1314 = vld [vmem:[#allocation2 + $0x8] sm:$0xff]
    %v1315 = vld [vmem:[#allocation2 + $0x10] sm:$0xff]
    %v1316 = vld [vmem:[#allocation2 + $0x18] sm:$0xff]
    %v1317 = vld [vmem:[#allocation2 + $0x20] sm:$0xff]
    %v1318 = vld [vmem:[#allocation2 + $0x28] sm:$0xff]
    %v1319 = vld [vmem:[#allocation2 + $0x30] sm:$0xff]
    %v1320 = vld [vmem:[#allocation2 + $0x38] sm:$0xff]
    %v1321 = vld [vmem:[#allocation13] sm:$0xff]
    %v1322 = vld [vmem:[#allocation13 + $0x8] sm:$0xff]
    %v1323 = vld [vmem:[#allocation13 + $0x10] sm:$0xff]
    %v1324 = vld [vmem:[#allocation13 + $0x18] sm:$0xff]
    %v1325 = vld [vmem:[%s6] sm:$0x1]
    %v1327 = vperm.slane %v1325, 0
    %v1330 = vsel %vm276, %v1313, 0
    %v1333 = vsel %vm276, %v1314, 0
    %v1336 = vsel %vm276, %v1315, 0
    %v1339 = vsel %vm276, %v1316, 0
    %v1342 = vsel %vm276, %v1317, 0
    %v1345 = vsel %vm276, %v1318, 0
    %v1348 = vsel %vm276, %v1319, 0
    %v1351 = vsel %vm276, %v1320, 0
    %1353 = vmatpush.msra.mxu0 0.0
    %1354 = vmatpush.msra.mxu0 0.0
    %1355 = vmatpush.msra.mxu0 0.0
    %1356 = vmatpush.msra.mxu0 0.0
    %1357 = vmatpush.msra.mxu0 0.0
    %1358 = vmatpush.msra.mxu0 0.0
    %1359 = vmatpush.msra.mxu0 0.0
    %1360 = vmatpush.msra.mxu0 0.0
    %1361 = vmatpush.msra.mxu0 0.0
    %1362 = vmatpush.msra.mxu0 0.0
    %1363 = vmatpush.msra.mxu0 0.0
    %1364 = vmatpush.msra.mxu0 0.0
    %1365 = vmatpush.msra.mxu0 %v1324
    %1366 = vmatpush.msra.mxu0 %v1323
    %1367 = vmatpush.msra.mxu0 %v1322
    %1368 = vmatpush.msra.mxu0 %v1321
    %1369 = vmatmul.f32.gmra.mxu0 %v1330
    %v1370 = vpop.f32.mrf.mxu0
    %v1371 = vadd.f32 %v1327, %v1370
    %1372 = vmatmul.f32.gmra.mxu0 %v1333
    %v1373 = vpop.f32.mrf.mxu0
    %v1374 = vadd.f32 %v1327, %v1373
    %1375 = vmatmul.f32.gmra.mxu0 %v1336
    %v1376 = vpop.f32.mrf.mxu0
    %v1377 = vadd.f32 %v1327, %v1376
    %1378 = vmatmul.f32.gmra.mxu0 %v1339
    %v1379 = vpop.f32.mrf.mxu0
    %v1380 = vadd.f32 %v1327, %v1379
    %1381 = vmatmul.f32.gmra.mxu0 %v1342
    %v1382 = vpop.f32.mrf.mxu0
    %v1383 = vadd.f32 %v1327, %v1382
    %1384 = vmatmul.f32.gmra.mxu0 %v1345
    %v1385 = vpop.f32.mrf.mxu0
    %v1386 = vadd.f32 %v1327, %v1385
    %1387 = vmatmul.f32.gmra.mxu0 %v1348
    %v1388 = vpop.f32.mrf.mxu0
    %v1389 = vadd.f32 %v1327, %v1388
    %1390 = vmatmul.f32.gmra.mxu0 %v1351
    %v1391 = vpop.f32.mrf.mxu0
    %v1392 = vadd.f32 %v1327, %v1391
    %1393 = vdwg.mxu0
    %v1394 = vtanh.pop %v1371
    %v1395 = vtanh.pop %v1374
    %v1396 = vtanh.pop %v1377
    %v1397 = vtanh.pop %v1380
    %v1398 = vtanh.pop %v1383
    %v1399 = vtanh.pop %v1386
    %v1400 = vtanh.pop %v1389
    %v1401 = vtanh.pop %v1392
    %1402 = vst [vmem:[#allocation15] sm:$0xff] %v1394
    %s1403 = scalar_lea.vmem [#allocation15], 8
    %1404 = vst [vmem:[%s1403] sm:$0xff] %v1395
    %s1405 = scalar_lea.vmem [#allocation15], 16
    %1406 = vst [vmem:[%s1405] sm:$0xff] %v1396
    %s1407 = scalar_lea.vmem [#allocation15], 24
    %1408 = vst [vmem:[%s1407] sm:$0xff] %v1397
    %s1409 = scalar_lea.vmem [#allocation15], 32
    %1410 = vst [vmem:[%s1409] sm:$0xff] %v1398
    %s1411 = scalar_lea.vmem [#allocation15], 40
    %1412 = vst [vmem:[%s1411] sm:$0xff] %v1399
    %s1413 = scalar_lea.vmem [#allocation15], 48
    %1414 = vst [vmem:[%s1413] sm:$0xff] %v1400
    %s1415 = scalar_lea.vmem [#allocation15], 56
    %1416 = vst [vmem:[%s1415] sm:$0xff] %v1401
    // Predicated region
    $region50: #{tpu_custom_call.1} parent=1 // pred_check
      _
    $region51: #{tpu_custom_call.1} parent=1 // pred_check_branch
      %1418 = sbr.rel (0) target = $region53
    $region52: #{tpu_custom_call.1} parent=1 // pred_region
      %1420 = vsyncadd [#allocation9], 0
      %s1421 = sshll.u32 [#allocation15], 4
      %s1422 = int_to_ptr.vmem [resolvable:$true] %s1421
      %s1423 = sshll.u32 %s7, 4
      %s1424 = int_to_ptr.hbm [resolvable:$true] %s1423
      %1429 = dma.vmem_to_hbm [thread:$0]  %s1422, 1024, %s1424, [#allocation9], 128, 128, 8
    $region53: #{tpu_custom_call.1} parent=1 // pred_fallthru
      _
    // Predicated region
    $region54: #{tpu_custom_call.1} parent=1 // pred_check
      _
    $region55: #{tpu_custom_call.1} parent=1 // pred_check_branch
      %1431 = sbr.rel (0) target = $region57
    $region56: #{tpu_custom_call.1} parent=1 // pred_region
      %1433 = dma.done [#allocation9], 1024
    $region57: #{tpu_custom_call.1} parent=1 // pred_fallthru
      _
    %1434 = vsyncpa [#allocation8], 1
    %1435 = vsyncpa [#allocation11], 1
    %1436 = vsyncpa [#allocation14], 1
    %1437 = vsyncpa [#allocation9], 1

</llo_original>
